<compile_context>
chip_gen: v7x
topology: tpu7x:2x2x1
jax: 0.10.0
libtpu: 0.0.40
codegen_flags: <defaults>
</compile_context>

<pallas_src>
import math
import functools

import jax
import jax.numpy as jnp
from jax.experimental import pallas as pl
from jax.experimental.pallas import tpu as pltpu

LN_EPS = 1e-12


def _layernorm2d(x, g, b):
    # x: [S, D] f32, g/b: [1, D] f32
    mu = jnp.mean(x, axis=-1, keepdims=True)
    var = jnp.mean((x - mu) ** 2, axis=-1, keepdims=True)
    return (x - mu) * jax.lax.rsqrt(var + LN_EPS) * g + b


def _gelu(x):
    # tanh approximation of GELU (original BERT activation).
    return 0.5 * x * (1.0 + jnp.tanh(0.7978845608028654 * (x + 0.044715 * x * x * x)))


def _vmem_limit(nbytes):
    # Generation-aware: clamp to 3/4 of physical VMEM (≈48 MiB on v7x's 64 MiB,
    # ≈96 MiB on v5e/v6e's 128 MiB) so Mosaic keeps headroom for its own
    # internal scratch and double buffers.
    cap = 64 << 20
    try:
        cap = int(getattr(pltpu.get_tpu_info(), "vmem_capacity_bytes", cap))
    except Exception:
        pass
    ceiling = (cap * 3) // 4
    return int(min(max(nbytes + (4 << 20), 16 << 20), ceiling))


# ---------------------------------------------------------------------------
# Fused kernel: embed-LN (l==0) + encoder layer l + SQuAD heads (l==L-1)
# Grid = (B, L); activation carried in a VMEM f32 scratch across the L axis.
# ---------------------------------------------------------------------------
def bert_squad_kernel(num_heads,
                      emb_ref, mask_ref, emb_g_ref, emb_b_ref,
                      wqkv_ref, bqkv_ref, wo_ref, bo_ref,
                      ln1_g_ref, ln1_b_ref,
                      w1_ref, b1_ref, w2_ref, b2_ref,
                      ln2_g_ref, ln2_b_ref,
                      head_w_ref, head_b_ref,
                      o_ref,
                      x_sc):
    layer = pl.program_id(1)
    last_layer = pl.num_programs(1) - 1
    S, H = x_sc.shape
    dh = H // num_heads
    scale = 1.0 / math.sqrt(dh)

    # ---- layer 0: embedding LayerNorm into the VMEM-carried activation ------
    @pl.when(layer == 0)
    def _():
        x_sc[...] = _layernorm2d(emb_ref[...], emb_g_ref[...], emb_b_ref[...])

    xb = x_sc[...]                                      # [S, H] f32
    xb_bf = xb.astype(jnp.bfloat16)
    # Hoisted mask broadcast (JAX does not CSE broadcast_in_dim).
    mbias = jnp.broadcast_to(mask_ref[...], (S, S))     # [S, S] f32 additive bias

    # Fused Q|K|V projection: one [S,H] x [H,3H] MXU matmul, f32 accumulation.
    qkv = jnp.dot(xb_bf, wqkv_ref[...],
                  preferred_element_type=jnp.float32) + bqkv_ref[...]   # [S, 3H]
    qkv_bf = qkv.astype(jnp.bfloat16)                   # cast once for all heads

    wo = wo_ref[...]                                    # [H, H] bf16, loaded once
    # Per-head attention; each head's context is pushed straight through its
    # slice of the output projection into an f32 accumulator (no concat).
    attn = jnp.zeros((S, H), jnp.float32)
    for n in range(num_heads):
        lo = n * dh
        q = qkv_bf[:, lo:lo + dh]
        k = qkv_bf[:, H + lo:H + lo + dh]
        v = qkv_bf[:, 2 * H + lo:2 * H + lo + dh]

        s = jax.lax.dot_general(q, k, (((1,), (1,)), ((), ())),
                                preferred_element_type=jnp.float32) * scale
        s = s + mbias                                   # mask add in f32
        s = s - jnp.max(s, axis=-1, keepdims=True)
        # TODO(synk): on v6e/v7x the exp/tanh could run in bf16 on the EUP for
        # ~2x throughput; kept f32 so the same kernel is also optimal on v5e.
        p = jnp.exp(s)
        p = p * pl.reciprocal(jnp.sum(p, axis=-1, keepdims=True), approx=True)
        # TODO(synk): attention dropout (attn_drop_prob) omitted — inference.
        ctx = jnp.dot(p.astype(jnp.bfloat16), v,
                      preferred_element_type=jnp.float32)               # [S, dh]
        attn = attn + jnp.dot(ctx.astype(jnp.bfloat16), wo[lo:lo + dh, :],
                              preferred_element_type=jnp.float32)       # [S, H]
    attn = attn + bo_ref[...]

    # Residual + LayerNorm 1 (hidden dropout = identity).
    x1 = _layernorm2d(xb + attn, ln1_g_ref[...], ln1_b_ref[...])

    # Feed-forward: bf16 matmuls, f32 accumulation, GELU in f32.
    h = jnp.dot(x1.astype(jnp.bfloat16), w1_ref[...],
                preferred_element_type=jnp.float32) + b1_ref[...]
    h = _gelu(h)
    ff = jnp.dot(h.astype(jnp.bfloat16), w2_ref[...],
                 preferred_element_type=jnp.float32) + b2_ref[...]

    x2 = _layernorm2d(x1 + ff, ln2_g_ref[...], ln2_b_ref[...])
    x_sc[...] = x2                                      # carry to next layer

    # ---- last layer: SQuAD start/end heads, lane-dense [2, S] output --------
    @pl.when(layer == last_layer)
    def _():
        logits = jax.lax.dot_general(head_w_ref[...], x2.astype(jnp.bfloat16),
                                     (((1,), (1,)), ((), ())),
                                     preferred_element_type=jnp.float32)  # [2,S]
        o_ref[...] = logits + head_b_ref[...]


# ---------------------------------------------------------------------------
# Parameter init (deterministic, synthetic — no checkpoint load)
# ---------------------------------------------------------------------------
def init_params(key, *, vocab, hidden, num_layers, inter, max_seq_len):
    def nrm(k, shape, std=0.02):
        return (std * jax.random.normal(k, shape)).astype(jnp.float32)

    ks = jax.random.split(key, 6 + num_layers)
    p = dict(
        word_emb=nrm(ks[0], (vocab, hidden)),
        pos_emb=nrm(ks[1], (max_seq_len, hidden)),
        tok_emb=nrm(ks[2], (2, hidden)),
        emb_ln_g=jnp.ones((1, hidden), jnp.float32),
        emb_ln_b=jnp.zeros((1, hidden), jnp.float32),
        head_w=nrm(ks[3], (hidden, 2)),          # [:, 0] = p_start, [:, 1] = p_end
        head_b=jnp.zeros((1, 2), jnp.float32),
        layers=[],
    )
    for l in range(num_layers):
        lk = jax.random.split(ks[6 + l], 6)
        p['layers'].append(dict(
            wq=nrm(lk[0], (hidden, hidden)), bq=jnp.zeros((1, hidden), jnp.float32),
            wk=nrm(lk[1], (hidden, hidden)), bk=jnp.zeros((1, hidden), jnp.float32),
            wv=nrm(lk[2], (hidden, hidden)), bv=jnp.zeros((1, hidden), jnp.float32),
            wo=nrm(lk[3], (hidden, hidden)), bo=jnp.zeros((1, hidden), jnp.float32),
            ln1_g=jnp.ones((1, hidden), jnp.float32), ln1_b=jnp.zeros((1, hidden), jnp.float32),
            w1=nrm(lk[4], (hidden, inter)), b1=jnp.zeros((1, inter), jnp.float32),
            w2=nrm(lk[5], (inter, hidden)), b2=jnp.zeros((1, hidden), jnp.float32),
            ln2_g=jnp.ones((1, hidden), jnp.float32), ln2_b=jnp.zeros((1, hidden), jnp.float32),
        ))
    return p


# ---------------------------------------------------------------------------
# Forward wrapper (gathers / weight stacking / pallas_call plumbing)
# ---------------------------------------------------------------------------
def squad_bert_forward(params, input_ids, token_type_ids, *, num_heads):
    B, S = input_ids.shape
    H = params['word_emb'].shape[1]
    I = params['layers'][0]['w1'].shape[1]
    L = len(params['layers'])

    # Embedding gathers are plain-JAX glue (table gather stays outside Pallas).
    emb = (params['word_emb'][input_ids]
           + params['pos_emb'][:S][None, :, :]
           + params['tok_emb'][token_type_ids]).astype(jnp.float32)        # [B,S,H]

    # input_mask = (input_ids == 0)  -> additive bias on attention scores.
    mask_bias = jnp.where(input_ids == 0, -1e9, 0.0).astype(jnp.float32)[:, None, :]  # [B,1,S]

    # Stack per-layer weights along a leading L axis (bf16 MXU operands); the
    # layer loop becomes the second grid axis so weights are double-buffered.
    def stack(name, dtype=jnp.float32):
        return jnp.stack([lp[name] for lp in params['layers']]).astype(dtype)

    wqkv = jnp.stack([jnp.concatenate([lp['wq'], lp['wk'], lp['wv']], axis=1)
                      for lp in params['layers']]).astype(jnp.bfloat16)    # [L,H,3H]
    bqkv = jnp.stack([jnp.concatenate([lp['bq'], lp['bk'], lp['bv']], axis=1)
                      for lp in params['layers']])                         # [L,1,3H]
    wo = stack('wo', jnp.bfloat16); bo = stack('bo')
    ln1_g = stack('ln1_g'); ln1_b = stack('ln1_b')
    w1 = stack('w1', jnp.bfloat16); b1 = stack('b1')
    w2 = stack('w2', jnp.bfloat16); b2 = stack('b2')
    ln2_g = stack('ln2_g'); ln2_b = stack('ln2_b')

    head_wT = params['head_w'].T.astype(jnp.bfloat16)      # [2, H] row0=start,1=end
    head_b = params['head_b'].reshape(2, 1)                # [2, 1] f32

    batch_map = lambda b, l: (b, 0, 0)     # fetched once per b (constant over L)
    layer_map = lambda b, l: (l, 0, 0)     # new weight block each layer step
    const2 = lambda b, l: (0, 0)

    in_specs = [
        pl.BlockSpec((None, S, H), batch_map),       # emb (read at l==0 only)
        pl.BlockSpec((None, 1, S), batch_map),       # mask bias
        pl.BlockSpec((1, H), const2),                # emb LN gamma
        pl.BlockSpec((1, H), const2),                # emb LN beta
        pl.BlockSpec((None, H, 3 * H), layer_map),   # wqkv (bf16)
        pl.BlockSpec((None, 1, 3 * H), layer_map),   # bqkv
        pl.BlockSpec((None, H, H), layer_map),       # wo (bf16)
        pl.BlockSpec((None, 1, H), layer_map),       # bo
        pl.BlockSpec((None, 1, H), layer_map),       # ln1_g
        pl.BlockSpec((None, 1, H), layer_map),       # ln1_b
        pl.BlockSpec((None, H, I), layer_map),       # w1 (bf16)
        pl.BlockSpec((None, 1, I), layer_map),       # b1
        pl.BlockSpec((None, I, H), layer_map),       # w2 (bf16)
        pl.BlockSpec((None, 1, H), layer_map),       # b2
        pl.BlockSpec((None, 1, H), layer_map),       # ln2_g
        pl.BlockSpec((None, 1, H), layer_map),       # ln2_b
        pl.BlockSpec((2, H), const2),                # SQuAD head weights (bf16)
        pl.BlockSpec((2, 1), const2),                # SQuAD head bias
    ]

    # VMEM working-set estimate (double-buffered weight + per-batch blocks,
    # carried activation scratch, in-kernel temporaries).
    per_layer_w = (3 * H * H + H * H + 2 * H * I) * 2 + (3 * H + H + I + 5 * H) * 4
    per_b_io = (S * H + S + 2 * S) * 4
    temporaries = (4 * S * H + S * S + S * I + 4 * H) * 4
    vmem_need = 2 * per_layer_w + 2 * per_b_io + S * H * 4 + temporaries

    flops = B * L * (2 * S * H * 3 * H      # fused QKV projection
                     + 4 * S * S * H        # scores + context (all heads)
                     + 2 * S * H * H        # output projection (per-head slices)
                     + 4 * S * H * I)       # FFN
    flops += B * 2 * 2 * S * H              # SQuAD heads
    cost = pl.CostEstimate(
        flops=int(flops),
        transcendentals=int(B * L * (num_heads * S * S + S * I)),
        bytes_accessed=int(L * per_layer_w + B * per_b_io))

    logits = pl.pallas_call(
        functools.partial(bert_squad_kernel, num_heads),
        grid=(B, L),
        out_shape=jax.ShapeDtypeStruct((B, 2, S), jnp.float32),
        in_specs=in_specs,
        out_specs=pl.BlockSpec((None, 2, S), batch_map),
        scratch_shapes=[pltpu.VMEM((S, H), jnp.float32)],   # carried activation
        compiler_params=pltpu.CompilerParams(
            dimension_semantics=("parallel", "arbitrary"),
            vmem_limit_bytes=_vmem_limit(vmem_need)),
        cost_estimate=cost,
    )(emb, mask_bias, params['emb_ln_g'], params['emb_ln_b'],
      wqkv, bqkv, wo, bo, ln1_g, ln1_b, w1, b1, w2, b2, ln2_g, ln2_b,
      head_wT, head_b)

    # TODO(synk): for long-S / small-B serving on v7x, a q-tile grid axis
    # (flash-style online softmax) would give the second TensorCore work.
    p_start_logits = logits[:, 0, :]
    p_end_logits = logits[:, 1, :]
    return p_start_logits, p_end_logits


if __name__ == "__main__":
    # Small shapes consistent with the module's forward:
    B, S = 2, 8                  # batch, sequence length
    H, L, NH, I = 32, 2, 4, 64   # hidden, layers, heads, intermediate
    V, MAX_S = 100, 16           # vocab size, max_seq_len

    key = jax.random.PRNGKey(0)
    pkey, ikey = jax.random.split(key, 2)

    params = init_params(pkey, vocab=V, hidden=H, num_layers=L,
                         inter=I, max_seq_len=MAX_S)

    input_ids = jax.random.randint(ikey, (B, S), 1, V, dtype=jnp.int32)
    input_ids = input_ids.at[:, -2:].set(0)   # padding -> exercises the attention mask
    token_type_ids = jnp.concatenate(
        [jnp.zeros((B, S // 2), jnp.int32), jnp.ones((B, S - S // 2), jnp.int32)],
        axis=1)

    p_start, p_end = squad_bert_forward(params, input_ids, token_type_ids, num_heads=NH)
    jax.block_until_ready((p_start, p_end))

    assert p_start.shape == (B, S) and p_end.shape == (B, S)
    assert bool(jnp.all(jnp.isfinite(p_start))) and bool(jnp.all(jnp.isfinite(p_end)))
    print("KERNEL_OK")
</pallas_src>

<mosaic_0001>
module attributes {stable_mosaic.version = 11 : i64} {
  func.func @bert_squad_kernel(%arg0: i32, %arg1: i32, %arg2: memref<1x8x32xf32, #tpu.memory_space<vmem>>, %arg3: memref<1x1x8xf32, #tpu.memory_space<vmem>>, %arg4: memref<1x32xf32, #tpu.memory_space<vmem>>, %arg5: memref<1x32xf32, #tpu.memory_space<vmem>>, %arg6: memref<1x32x96xbf16, #tpu.memory_space<vmem>>, %arg7: memref<1x1x96xf32, #tpu.memory_space<vmem>>, %arg8: memref<1x32x32xbf16, #tpu.memory_space<vmem>>, %arg9: memref<1x1x32xf32, #tpu.memory_space<vmem>>, %arg10: memref<1x1x32xf32, #tpu.memory_space<vmem>>, %arg11: memref<1x1x32xf32, #tpu.memory_space<vmem>>, %arg12: memref<1x32x64xbf16, #tpu.memory_space<vmem>>, %arg13: memref<1x1x64xf32, #tpu.memory_space<vmem>>, %arg14: memref<1x64x32xbf16, #tpu.memory_space<vmem>>, %arg15: memref<1x1x32xf32, #tpu.memory_space<vmem>>, %arg16: memref<1x1x32xf32, #tpu.memory_space<vmem>>, %arg17: memref<1x1x32xf32, #tpu.memory_space<vmem>>, %arg18: memref<2x32xbf16, #tpu.memory_space<vmem>>, %arg19: memref<2x1xf32, #tpu.memory_space<vmem>>, %arg20: memref<1x2x8xf32, #tpu.memory_space<vmem>>, %arg21: memref<8x32xf32, #tpu.memory_space<vmem>>) attributes {dimension_semantics = [#tpu.dimension_semantics<parallel>, #tpu.dimension_semantics<arbitrary>], iteration_bounds = array<i64: 2, 2>, scalar_prefetch = 0 : i64, scratch_operands = 1 : i64, tpu.core_type = #tpu.core_type<tc>, window_params = [{transform_indices = @transform_0, window_bounds = array<i64: 1, 8, 32>}, {transform_indices = @transform_1, window_bounds = array<i64: 1, 1, 8>}, {pipeline_mode = #tpu.pipeline_mode<synchronous>, transform_indices = @transform_2, window_bounds = array<i64: 1, 32>}, {pipeline_mode = #tpu.pipeline_mode<synchronous>, transform_indices = @transform_3, window_bounds = array<i64: 1, 32>}, {transform_indices = @transform_4, window_bounds = array<i64: 1, 32, 96>}, {transform_indices = @transform_5, window_bounds = array<i64: 1, 1, 96>}, {transform_indices = @transform_6, window_bounds = array<i64: 1, 32, 32>}, {transform_indices = @transform_7, window_bounds = array<i64: 1, 1, 32>}, {transform_indices = @transform_8, window_bounds = array<i64: 1, 1, 32>}, {transform_indices = @transform_9, window_bounds = array<i64: 1, 1, 32>}, {transform_indices = @transform_10, window_bounds = array<i64: 1, 32, 64>}, {transform_indices = @transform_11, window_bounds = array<i64: 1, 1, 64>}, {transform_indices = @transform_12, window_bounds = array<i64: 1, 64, 32>}, {transform_indices = @transform_13, window_bounds = array<i64: 1, 1, 32>}, {transform_indices = @transform_14, window_bounds = array<i64: 1, 1, 32>}, {transform_indices = @transform_15, window_bounds = array<i64: 1, 1, 32>}, {pipeline_mode = #tpu.pipeline_mode<synchronous>, transform_indices = @transform_16, window_bounds = array<i64: 2, 32>}, {pipeline_mode = #tpu.pipeline_mode<synchronous>, transform_indices = @transform_17, window_bounds = array<i64: 2, 1>}, {transform_indices = @transform_18, window_bounds = array<i64: 1, 2, 8>}]} {
    %c0_i32 = arith.constant 0 : i32
    %0 = arith.cmpi eq, %arg1, %c0_i32 : i32
    %1 = arith.extui %0 : i1 to i32
    %c0_i32_0 = arith.constant 0 : i32
    %2 = arith.cmpi ne, %1, %c0_i32_0 : i32
    scf.if %2 {
      %c0_85 = arith.constant 0 : index
      %c0_86 = arith.constant 0 : index
      %c0_87 = arith.constant 0 : index
      %203 = vector.load %arg2[%c0_85, %c0_86, %c0_87] : memref<1x8x32xf32, #tpu.memory_space<vmem>>, vector<1x8x32xf32>
      %204 = vector.shape_cast %203 : vector<1x8x32xf32> to vector<8x32xf32>
      %c0_88 = arith.constant 0 : index
      %c0_89 = arith.constant 0 : index
      %205 = vector.load %arg4[%c0_88, %c0_89] : memref<1x32xf32, #tpu.memory_space<vmem>>, vector<1x32xf32>
      %c0_90 = arith.constant 0 : index
      %c0_91 = arith.constant 0 : index
      %206 = vector.load %arg5[%c0_90, %c0_91] : memref<1x32xf32, #tpu.memory_space<vmem>>, vector<1x32xf32>
      %cst_92 = arith.constant dense<0.000000e+00> : vector<8xf32>
      %207 = vector.multi_reduction <add>, %204, %cst_92 [1] : vector<8x32xf32> to vector<8xf32>
      %208 = vector.shape_cast %207 : vector<8xf32> to vector<8x1xf32>
      %cst_93 = arith.constant 3.200000e+01 : f32
      %209 = vector.broadcast %cst_93 : f32 to vector<8x1xf32>
      %210 = arith.divf %208, %209 : vector<8x1xf32>
      %211 = vector.broadcast %210 : vector<8x1xf32> to vector<8x32xf32>
      %212 = arith.subf %204, %211 : vector<8x32xf32>
      %213 = arith.mulf %212, %212 : vector<8x32xf32>
      %cst_94 = arith.constant dense<0.000000e+00> : vector<8xf32>
      %214 = vector.multi_reduction <add>, %213, %cst_94 [1] : vector<8x32xf32> to vector<8xf32>
      %215 = vector.shape_cast %214 : vector<8xf32> to vector<8x1xf32>
      %cst_95 = arith.constant 3.200000e+01 : f32
      %216 = vector.broadcast %cst_95 : f32 to vector<8x1xf32>
      %217 = arith.divf %215, %216 : vector<8x1xf32>
      %218 = vector.broadcast %210 : vector<8x1xf32> to vector<8x32xf32>
      %219 = arith.subf %204, %218 : vector<8x32xf32>
      %cst_96 = arith.constant 9.99999996E-13 : f32
      %220 = vector.broadcast %cst_96 : f32 to vector<8x1xf32>
      %221 = arith.addf %217, %220 : vector<8x1xf32>
      %222 = math.rsqrt %221 : vector<8x1xf32>
      %223 = vector.broadcast %222 : vector<8x1xf32> to vector<8x32xf32>
      %224 = arith.mulf %219, %223 : vector<8x32xf32>
      %225 = vector.broadcast %205 : vector<1x32xf32> to vector<8x32xf32>
      %226 = arith.mulf %224, %225 : vector<8x32xf32>
      %227 = vector.broadcast %206 : vector<1x32xf32> to vector<8x32xf32>
      %228 = arith.addf %226, %227 : vector<8x32xf32>
      %c0_97 = arith.constant 0 : index
      %c0_98 = arith.constant 0 : index
      %229 = vector.load %arg21[%c0_97, %c0_98] : memref<8x32xf32, #tpu.memory_space<vmem>>, vector<8x32xf32>
      tpu.vector_store %arg21[%c0_97, %c0_98], %228 {strides = array<i32>} : memref<8x32xf32, #tpu.memory_space<vmem>>, vector<8x32xf32>,
    } else {
    }
    %c0 = arith.constant 0 : index
    %c0_1 = arith.constant 0 : index
    %3 = vector.load %arg21[%c0, %c0_1] : memref<8x32xf32, #tpu.memory_space<vmem>>, vector<8x32xf32>
    %4 = arith.truncf %3 : vector<8x32xf32> to vector<8x32xbf16>
    %c0_2 = arith.constant 0 : index
    %c0_3 = arith.constant 0 : index
    %c0_4 = arith.constant 0 : index
    %5 = vector.load %arg3[%c0_2, %c0_3, %c0_4] : memref<1x1x8xf32, #tpu.memory_space<vmem>>, vector<1x1x8xf32>
    %6 = vector.shape_cast %5 : vector<1x1x8xf32> to vector<1x8xf32>
    %7 = vector.shape_cast %6 : vector<1x8xf32> to vector<1x8xf32>
    %8 = vector.broadcast %7 : vector<1x8xf32> to vector<8x8xf32>
    %c0_5 = arith.constant 0 : index
    %c0_6 = arith.constant 0 : index
    %c0_7 = arith.constant 0 : index
    %9 = vector.load %arg6[%c0_5, %c0_6, %c0_7] : memref<1x32x96xbf16, #tpu.memory_space<vmem>>, vector<1x32x96xbf16>
    %10 = vector.shape_cast %9 : vector<1x32x96xbf16> to vector<32x96xbf16>
    %cst = arith.constant dense<0.000000e+00> : vector<8x96xf32>
    %11 = tpu.matmul %4, %10, %cst {dimension_numbers = #tpu.dot_dimension_numbers<[1], [0], [0], [1], [0, 0, 1, 1], [], []>} : vector<8x32xbf16>, vector<32x96xbf16>, vector<8x96xf32> -> vector<8x96xf32>
    %c0_8 = arith.constant 0 : index
    %c0_9 = arith.constant 0 : index
    %c0_10 = arith.constant 0 : index
    %12 = vector.load %arg7[%c0_8, %c0_9, %c0_10] : memref<1x1x96xf32, #tpu.memory_space<vmem>>, vector<1x1x96xf32>
    %13 = vector.shape_cast %12 : vector<1x1x96xf32> to vector<1x96xf32>
    %14 = vector.broadcast %13 : vector<1x96xf32> to vector<8x96xf32>
    %15 = arith.addf %11, %14 : vector<8x96xf32>
    %16 = arith.truncf %15 : vector<8x96xf32> to vector<8x96xbf16>
    %c0_11 = arith.constant 0 : index
    %c0_12 = arith.constant 0 : index
    %c0_13 = arith.constant 0 : index
    %17 = vector.load %arg8[%c0_11, %c0_12, %c0_13] : memref<1x32x32xbf16, #tpu.memory_space<vmem>>, vector<1x32x32xbf16>
    %18 = vector.shape_cast %17 : vector<1x32x32xbf16> to vector<32x32xbf16>
    %cst_14 = arith.constant 0.000000e+00 : f32
    %19 = vector.broadcast %cst_14 : f32 to vector<8x32xf32>
    %20 = vector.extract_strided_slice %16 {offsets = [0, 0], sizes = [8, 8], strides = [1, 1]} : vector<8x96xbf16> to vector<8x8xbf16>
    %21 = vector.extract_strided_slice %16 {offsets = [0, 32], sizes = [8, 8], strides = [1, 1]} : vector<8x96xbf16> to vector<8x8xbf16>
    %22 = vector.extract_strided_slice %16 {offsets = [0, 64], sizes = [8, 8], strides = [1, 1]} : vector<8x96xbf16> to vector<8x8xbf16>
    %cst_15 = arith.constant dense<0.000000e+00> : vector<8x8xf32>
    %23 = tpu.matmul %20, %21, %cst_15 {dimension_numbers = #tpu.dot_dimension_numbers<[1], [1], [0], [0], [0, 0, 1, 0], [], []>} : vector<8x8xbf16>, vector<8x8xbf16>, vector<8x8xf32> -> vector<8x8xf32>
    %cst_16 = arith.constant 0.353553385 : f32
    %24 = vector.broadcast %cst_16 : f32 to vector<8x8xf32>
    %25 = arith.mulf %23, %24 : vector<8x8xf32>
    %26 = arith.addf %25, %8 : vector<8x8xf32>
    %cst_17 = arith.constant dense<0xFF800000> : vector<8xf32>
    %27 = vector.multi_reduction <maximumf>, %26, %cst_17 [1] : vector<8x8xf32> to vector<8xf32>
    %28 = vector.shape_cast %27 : vector<8xf32> to vector<8x1xf32>
    %29 = vector.broadcast %28 : vector<8x1xf32> to vector<8x8xf32>
    %30 = arith.subf %26, %29 : vector<8x8xf32>
    %31 = math.exp %30 : vector<8x8xf32>
    %cst_18 = arith.constant dense<0.000000e+00> : vector<8xf32>
    %32 = vector.multi_reduction <add>, %31, %cst_18 [1] : vector<8x8xf32> to vector<8xf32>
    %33 = vector.shape_cast %32 : vector<8xf32> to vector<8x1xf32>
    %34 = tpu.reciprocal %33 {approx = true} : vector<8x1xf32> -> vector<8x1xf32>
    %35 = vector.broadcast %34 : vector<8x1xf32> to vector<8x8xf32>
    %36 = arith.mulf %31, %35 : vector<8x8xf32>
    %37 = arith.truncf %36 : vector<8x8xf32> to vector<8x8xbf16>
    %cst_19 = arith.constant dense<0.000000e+00> : vector<8x8xf32>
    %38 = tpu.matmul %37, %22, %cst_19 {dimension_numbers = #tpu.dot_dimension_numbers<[1], [0], [0], [1], [0, 0, 1, 1], [], []>} : vector<8x8xbf16>, vector<8x8xbf16>, vector<8x8xf32> -> vector<8x8xf32>
    %39 = arith.truncf %38 : vector<8x8xf32> to vector<8x8xbf16>
    %40 = vector.extract_strided_slice %18 {offsets = [0, 0], sizes = [8, 32], strides = [1, 1]} : vector<32x32xbf16> to vector<8x32xbf16>
    %cst_20 = arith.constant dense<0.000000e+00> : vector<8x32xf32>
    %41 = tpu.matmul %39, %40, %cst_20 {dimension_numbers = #tpu.dot_dimension_numbers<[1], [0], [0], [1], [0, 0, 1, 1], [], []>} : vector<8x8xbf16>, vector<8x32xbf16>, vector<8x32xf32> -> vector<8x32xf32>
    %42 = arith.addf %19, %41 : vector<8x32xf32>
    %43 = vector.extract_strided_slice %16 {offsets = [0, 8], sizes = [8, 8], strides = [1, 1]} : vector<8x96xbf16> to vector<8x8xbf16>
    %44 = vector.extract_strided_slice %16 {offsets = [0, 40], sizes = [8, 8], strides = [1, 1]} : vector<8x96xbf16> to vector<8x8xbf16>
    %45 = vector.extract_strided_slice %16 {offsets = [0, 72], sizes = [8, 8], strides = [1, 1]} : vector<8x96xbf16> to vector<8x8xbf16>
    %cst_21 = arith.constant dense<0.000000e+00> : vector<8x8xf32>
    %46 = tpu.matmul %43, %44, %cst_21 {dimension_numbers = #tpu.dot_dimension_numbers<[1], [1], [0], [0], [0, 0, 1, 0], [], []>} : vector<8x8xbf16>, vector<8x8xbf16>, vector<8x8xf32> -> vector<8x8xf32>
    %cst_22 = arith.constant 0.353553385 : f32
    %47 = vector.broadcast %cst_22 : f32 to vector<8x8xf32>
    %48 = arith.mulf %46, %47 : vector<8x8xf32>
    %49 = arith.addf %48, %8 : vector<8x8xf32>
    %cst_23 = arith.constant dense<0xFF800000> : vector<8xf32>
    %50 = vector.multi_reduction <maximumf>, %49, %cst_23 [1] : vector<8x8xf32> to vector<8xf32>
    %51 = vector.shape_cast %50 : vector<8xf32> to vector<8x1xf32>
    %52 = vector.broadcast %51 : vector<8x1xf32> to vector<8x8xf32>
    %53 = arith.subf %49, %52 : vector<8x8xf32>
    %54 = math.exp %53 : vector<8x8xf32>
    %cst_24 = arith.constant dense<0.000000e+00> : vector<8xf32>
    %55 = vector.multi_reduction <add>, %54, %cst_24 [1] : vector<8x8xf32> to vector<8xf32>
    %56 = vector.shape_cast %55 : vector<8xf32> to vector<8x1xf32>
    %57 = tpu.reciprocal %56 {approx = true} : vector<8x1xf32> -> vector<8x1xf32>
    %58 = vector.broadcast %57 : vector<8x1xf32> to vector<8x8xf32>
    %59 = arith.mulf %54, %58 : vector<8x8xf32>
    %60 = arith.truncf %59 : vector<8x8xf32> to vector<8x8xbf16>
    %cst_25 = arith.constant dense<0.000000e+00> : vector<8x8xf32>
    %61 = tpu.matmul %60, %45, %cst_25 {dimension_numbers = #tpu.dot_dimension_numbers<[1], [0], [0], [1], [0, 0, 1, 1], [], []>} : vector<8x8xbf16>, vector<8x8xbf16>, vector<8x8xf32> -> vector<8x8xf32>
    %62 = arith.truncf %61 : vector<8x8xf32> to vector<8x8xbf16>
    %63 = vector.extract_strided_slice %18 {offsets = [8, 0], sizes = [8, 32], strides = [1, 1]} : vector<32x32xbf16> to vector<8x32xbf16>
    %cst_26 = arith.constant dense<0.000000e+00> : vector<8x32xf32>
    %64 = tpu.matmul %62, %63, %cst_26 {dimension_numbers = #tpu.dot_dimension_numbers<[1], [0], [0], [1], [0, 0, 1, 1], [], []>} : vector<8x8xbf16>, vector<8x32xbf16>, vector<8x32xf32> -> vector<8x32xf32>
    %65 = arith.addf %42, %64 : vector<8x32xf32>
    %66 = vector.extract_strided_slice %16 {offsets = [0, 16], sizes = [8, 8], strides = [1, 1]} : vector<8x96xbf16> to vector<8x8xbf16>
    %67 = vector.extract_strided_slice %16 {offsets = [0, 48], sizes = [8, 8], strides = [1, 1]} : vector<8x96xbf16> to vector<8x8xbf16>
    %68 = vector.extract_strided_slice %16 {offsets = [0, 80], sizes = [8, 8], strides = [1, 1]} : vector<8x96xbf16> to vector<8x8xbf16>
    %cst_27 = arith.constant dense<0.000000e+00> : vector<8x8xf32>
    %69 = tpu.matmul %66, %67, %cst_27 {dimension_numbers = #tpu.dot_dimension_numbers<[1], [1], [0], [0], [0, 0, 1, 0], [], []>} : vector<8x8xbf16>, vector<8x8xbf16>, vector<8x8xf32> -> vector<8x8xf32>
    %cst_28 = arith.constant 0.353553385 : f32
    %70 = vector.broadcast %cst_28 : f32 to vector<8x8xf32>
    %71 = arith.mulf %69, %70 : vector<8x8xf32>
    %72 = arith.addf %71, %8 : vector<8x8xf32>
    %cst_29 = arith.constant dense<0xFF800000> : vector<8xf32>
    %73 = vector.multi_reduction <maximumf>, %72, %cst_29 [1] : vector<8x8xf32> to vector<8xf32>
    %74 = vector.shape_cast %73 : vector<8xf32> to vector<8x1xf32>
    %75 = vector.broadcast %74 : vector<8x1xf32> to vector<8x8xf32>
    %76 = arith.subf %72, %75 : vector<8x8xf32>
    %77 = math.exp %76 : vector<8x8xf32>
    %cst_30 = arith.constant dense<0.000000e+00> : vector<8xf32>
    %78 = vector.multi_reduction <add>, %77, %cst_30 [1] : vector<8x8xf32> to vector<8xf32>
    %79 = vector.shape_cast %78 : vector<8xf32> to vector<8x1xf32>
    %80 = tpu.reciprocal %79 {approx = true} : vector<8x1xf32> -> vector<8x1xf32>
    %81 = vector.broadcast %80 : vector<8x1xf32> to vector<8x8xf32>
    %82 = arith.mulf %77, %81 : vector<8x8xf32>
    %83 = arith.truncf %82 : vector<8x8xf32> to vector<8x8xbf16>
    %cst_31 = arith.constant dense<0.000000e+00> : vector<8x8xf32>
    %84 = tpu.matmul %83, %68, %cst_31 {dimension_numbers = #tpu.dot_dimension_numbers<[1], [0], [0], [1], [0, 0, 1, 1], [], []>} : vector<8x8xbf16>, vector<8x8xbf16>, vector<8x8xf32> -> vector<8x8xf32>
    %85 = arith.truncf %84 : vector<8x8xf32> to vector<8x8xbf16>
    %86 = vector.extract_strided_slice %18 {offsets = [16, 0], sizes = [8, 32], strides = [1, 1]} : vector<32x32xbf16> to vector<8x32xbf16>
    %cst_32 = arith.constant dense<0.000000e+00> : vector<8x32xf32>
    %87 = tpu.matmul %85, %86, %cst_32 {dimension_numbers = #tpu.dot_dimension_numbers<[1], [0], [0], [1], [0, 0, 1, 1], [], []>} : vector<8x8xbf16>, vector<8x32xbf16>, vector<8x32xf32> -> vector<8x32xf32>
    %88 = arith.addf %65, %87 : vector<8x32xf32>
    %89 = vector.extract_strided_slice %16 {offsets = [0, 24], sizes = [8, 8], strides = [1, 1]} : vector<8x96xbf16> to vector<8x8xbf16>
    %90 = vector.extract_strided_slice %16 {offsets = [0, 56], sizes = [8, 8], strides = [1, 1]} : vector<8x96xbf16> to vector<8x8xbf16>
    %91 = vector.extract_strided_slice %16 {offsets = [0, 88], sizes = [8, 8], strides = [1, 1]} : vector<8x96xbf16> to vector<8x8xbf16>
    %cst_33 = arith.constant dense<0.000000e+00> : vector<8x8xf32>
    %92 = tpu.matmul %89, %90, %cst_33 {dimension_numbers = #tpu.dot_dimension_numbers<[1], [1], [0], [0], [0, 0, 1, 0], [], []>} : vector<8x8xbf16>, vector<8x8xbf16>, vector<8x8xf32> -> vector<8x8xf32>
    %cst_34 = arith.constant 0.353553385 : f32
    %93 = vector.broadcast %cst_34 : f32 to vector<8x8xf32>
    %94 = arith.mulf %92, %93 : vector<8x8xf32>
    %95 = arith.addf %94, %8 : vector<8x8xf32>
    %cst_35 = arith.constant dense<0xFF800000> : vector<8xf32>
    %96 = vector.multi_reduction <maximumf>, %95, %cst_35 [1] : vector<8x8xf32> to vector<8xf32>
    %97 = vector.shape_cast %96 : vector<8xf32> to vector<8x1xf32>
    %98 = vector.broadcast %97 : vector<8x1xf32> to vector<8x8xf32>
    %99 = arith.subf %95, %98 : vector<8x8xf32>
    %100 = math.exp %99 : vector<8x8xf32>
    %cst_36 = arith.constant dense<0.000000e+00> : vector<8xf32>
    %101 = vector.multi_reduction <add>, %100, %cst_36 [1] : vector<8x8xf32> to vector<8xf32>
    %102 = vector.shape_cast %101 : vector<8xf32> to vector<8x1xf32>
    %103 = tpu.reciprocal %102 {approx = true} : vector<8x1xf32> -> vector<8x1xf32>
    %104 = vector.broadcast %103 : vector<8x1xf32> to vector<8x8xf32>
    %105 = arith.mulf %100, %104 : vector<8x8xf32>
    %106 = arith.truncf %105 : vector<8x8xf32> to vector<8x8xbf16>
    %cst_37 = arith.constant dense<0.000000e+00> : vector<8x8xf32>
    %107 = tpu.matmul %106, %91, %cst_37 {dimension_numbers = #tpu.dot_dimension_numbers<[1], [0], [0], [1], [0, 0, 1, 1], [], []>} : vector<8x8xbf16>, vector<8x8xbf16>, vector<8x8xf32> -> vector<8x8xf32>
    %108 = arith.truncf %107 : vector<8x8xf32> to vector<8x8xbf16>
    %109 = vector.extract_strided_slice %18 {offsets = [24, 0], sizes = [8, 32], strides = [1, 1]} : vector<32x32xbf16> to vector<8x32xbf16>
    %cst_38 = arith.constant dense<0.000000e+00> : vector<8x32xf32>
    %110 = tpu.matmul %108, %109, %cst_38 {dimension_numbers = #tpu.dot_dimension_numbers<[1], [0], [0], [1], [0, 0, 1, 1], [], []>} : vector<8x8xbf16>, vector<8x32xbf16>, vector<8x32xf32> -> vector<8x32xf32>
    %111 = arith.addf %88, %110 : vector<8x32xf32>
    %c0_39 = arith.constant 0 : index
    %c0_40 = arith.constant 0 : index
    %c0_41 = arith.constant 0 : index
    %112 = vector.load %arg9[%c0_39, %c0_40, %c0_41] : memref<1x1x32xf32, #tpu.memory_space<vmem>>, vector<1x1x32xf32>
    %113 = vector.shape_cast %112 : vector<1x1x32xf32> to vector<1x32xf32>
    %114 = vector.broadcast %113 : vector<1x32xf32> to vector<8x32xf32>
    %115 = arith.addf %111, %114 : vector<8x32xf32>
    %116 = arith.addf %3, %115 : vector<8x32xf32>
    %c0_42 = arith.constant 0 : index
    %c0_43 = arith.constant 0 : index
    %c0_44 = arith.constant 0 : index
    %117 = vector.load %arg10[%c0_42, %c0_43, %c0_44] : memref<1x1x32xf32, #tpu.memory_space<vmem>>, vector<1x1x32xf32>
    %118 = vector.shape_cast %117 : vector<1x1x32xf32> to vector<1x32xf32>
    %c0_45 = arith.constant 0 : index
    %c0_46 = arith.constant 0 : index
    %c0_47 = arith.constant 0 : index
    %119 = vector.load %arg11[%c0_45, %c0_46, %c0_47] : memref<1x1x32xf32, #tpu.memory_space<vmem>>, vector<1x1x32xf32>
    %120 = vector.shape_cast %119 : vector<1x1x32xf32> to vector<1x32xf32>
    %cst_48 = arith.constant dense<0.000000e+00> : vector<8xf32>
    %121 = vector.multi_reduction <add>, %116, %cst_48 [1] : vector<8x32xf32> to vector<8xf32>
    %122 = vector.shape_cast %121 : vector<8xf32> to vector<8x1xf32>
    %cst_49 = arith.constant 3.200000e+01 : f32
    %123 = vector.broadcast %cst_49 : f32 to vector<8x1xf32>
    %124 = arith.divf %122, %123 : vector<8x1xf32>
    %125 = vector.broadcast %124 : vector<8x1xf32> to vector<8x32xf32>
    %126 = arith.subf %116, %125 : vector<8x32xf32>
    %127 = arith.mulf %126, %126 : vector<8x32xf32>
    %cst_50 = arith.constant dense<0.000000e+00> : vector<8xf32>
    %128 = vector.multi_reduction <add>, %127, %cst_50 [1] : vector<8x32xf32> to vector<8xf32>
    %129 = vector.shape_cast %128 : vector<8xf32> to vector<8x1xf32>
    %cst_51 = arith.constant 3.200000e+01 : f32
    %130 = vector.broadcast %cst_51 : f32 to vector<8x1xf32>
    %131 = arith.divf %129, %130 : vector<8x1xf32>
    %132 = vector.broadcast %124 : vector<8x1xf32> to vector<8x32xf32>
    %133 = arith.subf %116, %132 : vector<8x32xf32>
    %cst_52 = arith.constant 9.99999996E-13 : f32
    %134 = vector.broadcast %cst_52 : f32 to vector<8x1xf32>
    %135 = arith.addf %131, %134 : vector<8x1xf32>
    %136 = math.rsqrt %135 : vector<8x1xf32>
    %137 = vector.broadcast %136 : vector<8x1xf32> to vector<8x32xf32>
    %138 = arith.mulf %133, %137 : vector<8x32xf32>
    %139 = vector.broadcast %118 : vector<1x32xf32> to vector<8x32xf32>
    %140 = arith.mulf %138, %139 : vector<8x32xf32>
    %141 = vector.broadcast %120 : vector<1x32xf32> to vector<8x32xf32>
    %142 = arith.addf %140, %141 : vector<8x32xf32>
    %143 = arith.truncf %142 : vector<8x32xf32> to vector<8x32xbf16>
    %c0_53 = arith.constant 0 : index
    %c0_54 = arith.constant 0 : index
    %c0_55 = arith.constant 0 : index
    %144 = vector.load %arg12[%c0_53, %c0_54, %c0_55] : memref<1x32x64xbf16, #tpu.memory_space<vmem>>, vector<1x32x64xbf16>
    %145 = vector.shape_cast %144 : vector<1x32x64xbf16> to vector<32x64xbf16>
    %cst_56 = arith.constant dense<0.000000e+00> : vector<8x64xf32>
    %146 = tpu.matmul %143, %145, %cst_56 {dimension_numbers = #tpu.dot_dimension_numbers<[1], [0], [0], [1], [0, 0, 1, 1], [], []>} : vector<8x32xbf16>, vector<32x64xbf16>, vector<8x64xf32> -> vector<8x64xf32>
    %c0_57 = arith.constant 0 : index
    %c0_58 = arith.constant 0 : index
    %c0_59 = arith.constant 0 : index
    %147 = vector.load %arg13[%c0_57, %c0_58, %c0_59] : memref<1x1x64xf32, #tpu.memory_space<vmem>>, vector<1x1x64xf32>
    %148 = vector.shape_cast %147 : vector<1x1x64xf32> to vector<1x64xf32>
    %149 = vector.broadcast %148 : vector<1x64xf32> to vector<8x64xf32>
    %150 = arith.addf %146, %149 : vector<8x64xf32>
    %cst_60 = arith.constant 5.000000e-01 : f32
    %151 = vector.broadcast %cst_60 : f32 to vector<8x64xf32>
    %152 = arith.mulf %151, %150 : vector<8x64xf32>
    %cst_61 = arith.constant 4.471500e-02 : f32
    %153 = vector.broadcast %cst_61 : f32 to vector<8x64xf32>
    %154 = arith.mulf %153, %150 : vector<8x64xf32>
    %155 = arith.mulf %154, %150 : vector<8x64xf32>
    %156 = arith.mulf %155, %150 : vector<8x64xf32>
    %157 = arith.addf %150, %156 : vector<8x64xf32>
    %cst_62 = arith.constant 0.797884583 : f32
    %158 = vector.broadcast %cst_62 : f32 to vector<8x64xf32>
    %159 = arith.mulf %158, %157 : vector<8x64xf32>
    %160 = math.tanh %159 : vector<8x64xf32>
    %cst_63 = arith.constant 1.000000e+00 : f32
    %161 = vector.broadcast %cst_63 : f32 to vector<8x64xf32>
    %162 = arith.addf %161, %160 : vector<8x64xf32>
    %163 = arith.mulf %152, %162 : vector<8x64xf32>
    %164 = arith.truncf %163 : vector<8x64xf32> to vector<8x64xbf16>
    %c0_64 = arith.constant 0 : index
    %c0_65 = arith.constant 0 : index
    %c0_66 = arith.constant 0 : index
    %165 = vector.load %arg14[%c0_64, %c0_65, %c0_66] : memref<1x64x32xbf16, #tpu.memory_space<vmem>>, vector<1x64x32xbf16>
    %166 = vector.shape_cast %165 : vector<1x64x32xbf16> to vector<64x32xbf16>
    %cst_67 = arith.constant dense<0.000000e+00> : vector<8x32xf32>
    %167 = tpu.matmul %164, %166, %cst_67 {dimension_numbers = #tpu.dot_dimension_numbers<[1], [0], [0], [1], [0, 0, 1, 1], [], []>} : vector<8x64xbf16>, vector<64x32xbf16>, vector<8x32xf32> -> vector<8x32xf32>
    %c0_68 = arith.constant 0 : index
    %c0_69 = arith.constant 0 : index
    %c0_70 = arith.constant 0 : index
    %168 = vector.load %arg15[%c0_68, %c0_69, %c0_70] : memref<1x1x32xf32, #tpu.memory_space<vmem>>, vector<1x1x32xf32>
    %169 = vector.shape_cast %168 : vector<1x1x32xf32> to vector<1x32xf32>
    %170 = vector.broadcast %169 : vector<1x32xf32> to vector<8x32xf32>
    %171 = arith.addf %167, %170 : vector<8x32xf32>
    %172 = arith.addf %142, %171 : vector<8x32xf32>
    %c0_71 = arith.constant 0 : index
    %c0_72 = arith.constant 0 : index
    %c0_73 = arith.constant 0 : index
    %173 = vector.load %arg16[%c0_71, %c0_72, %c0_73] : memref<1x1x32xf32, #tpu.memory_space<vmem>>, vector<1x1x32xf32>
    %174 = vector.shape_cast %173 : vector<1x1x32xf32> to vector<1x32xf32>
    %c0_74 = arith.constant 0 : index
    %c0_75 = arith.constant 0 : index
    %c0_76 = arith.constant 0 : index
    %175 = vector.load %arg17[%c0_74, %c0_75, %c0_76] : memref<1x1x32xf32, #tpu.memory_space<vmem>>, vector<1x1x32xf32>
    %176 = vector.shape_cast %175 : vector<1x1x32xf32> to vector<1x32xf32>
    %cst_77 = arith.constant dense<0.000000e+00> : vector<8xf32>
    %177 = vector.multi_reduction <add>, %172, %cst_77 [1] : vector<8x32xf32> to vector<8xf32>
    %178 = vector.shape_cast %177 : vector<8xf32> to vector<8x1xf32>
    %cst_78 = arith.constant 3.200000e+01 : f32
    %179 = vector.broadcast %cst_78 : f32 to vector<8x1xf32>
    %180 = arith.divf %178, %179 : vector<8x1xf32>
    %181 = vector.broadcast %180 : vector<8x1xf32> to vector<8x32xf32>
    %182 = arith.subf %172, %181 : vector<8x32xf32>
    %183 = arith.mulf %182, %182 : vector<8x32xf32>
    %cst_79 = arith.constant dense<0.000000e+00> : vector<8xf32>
    %184 = vector.multi_reduction <add>, %183, %cst_79 [1] : vector<8x32xf32> to vector<8xf32>
    %185 = vector.shape_cast %184 : vector<8xf32> to vector<8x1xf32>
    %cst_80 = arith.constant 3.200000e+01 : f32
    %186 = vector.broadcast %cst_80 : f32 to vector<8x1xf32>
    %187 = arith.divf %185, %186 : vector<8x1xf32>
    %188 = vector.broadcast %180 : vector<8x1xf32> to vector<8x32xf32>
    %189 = arith.subf %172, %188 : vector<8x32xf32>
    %cst_81 = arith.constant 9.99999996E-13 : f32
    %190 = vector.broadcast %cst_81 : f32 to vector<8x1xf32>
    %191 = arith.addf %187, %190 : vector<8x1xf32>
    %192 = math.rsqrt %191 : vector<8x1xf32>
    %193 = vector.broadcast %192 : vector<8x1xf32> to vector<8x32xf32>
    %194 = arith.mulf %189, %193 : vector<8x32xf32>
    %195 = vector.broadcast %174 : vector<1x32xf32> to vector<8x32xf32>
    %196 = arith.mulf %194, %195 : vector<8x32xf32>
    %197 = vector.broadcast %176 : vector<1x32xf32> to vector<8x32xf32>
    %198 = arith.addf %196, %197 : vector<8x32xf32>
    %c0_82 = arith.constant 0 : index
    %c0_83 = arith.constant 0 : index
    %199 = vector.load %arg21[%c0_82, %c0_83] : memref<8x32xf32, #tpu.memory_space<vmem>>, vector<8x32xf32>
    tpu.vector_store %arg21[%c0_82, %c0_83], %198 {strides = array<i32>} : memref<8x32xf32, #tpu.memory_space<vmem>>, vector<8x32xf32>,
    %c1_i32 = arith.constant 1 : i32
    %200 = arith.cmpi eq, %arg1, %c1_i32 : i32
    %201 = arith.extui %200 : i1 to i32
    %c0_i32_84 = arith.constant 0 : i32
    %202 = arith.cmpi ne, %201, %c0_i32_84 : i32
    scf.if %202 {
      %c0_85 = arith.constant 0 : index
      %c0_86 = arith.constant 0 : index
      %203 = vector.load %arg18[%c0_85, %c0_86] : memref<2x32xbf16, #tpu.memory_space<vmem>>, vector<2x32xbf16>
      %204 = arith.truncf %198 : vector<8x32xf32> to vector<8x32xbf16>
      %cst_87 = arith.constant dense<0.000000e+00> : vector<2x8xf32>
      %205 = tpu.matmul %203, %204, %cst_87 {dimension_numbers = #tpu.dot_dimension_numbers<[1], [1], [0], [0], [0, 0, 1, 0], [], []>} : vector<2x32xbf16>, vector<8x32xbf16>, vector<2x8xf32> -> vector<2x8xf32>
      %c0_88 = arith.constant 0 : index
      %c0_89 = arith.constant 0 : index
      %206 = vector.load %arg19[%c0_88, %c0_89] : memref<2x1xf32, #tpu.memory_space<vmem>>, vector<2x1xf32>
      %207 = vector.broadcast %206 : vector<2x1xf32> to vector<2x8xf32>
      %208 = arith.addf %205, %207 : vector<2x8xf32>
      %c0_90 = arith.constant 0 : index
      %c0_91 = arith.constant 0 : index
      %c0_92 = arith.constant 0 : index
      %209 = vector.load %arg20[%c0_90, %c0_91, %c0_92] : memref<1x2x8xf32, #tpu.memory_space<vmem>>, vector<1x2x8xf32>
      %210 = vector.shape_cast %209 : vector<1x2x8xf32> to vector<2x8xf32>
      %211 = vector.shape_cast %208 : vector<2x8xf32> to vector<1x2x8xf32>
      tpu.vector_store %arg20[%c0_90, %c0_91, %c0_92], %211 {strides = array<i32>} : memref<1x2x8xf32, #tpu.memory_space<vmem>>, vector<1x2x8xf32>,
    } else {
    }
    return
  }
  func.func @transform_0(%arg0: i32, %arg1: i32) -> (i32, i32, i32) {
    %c0_i32 = arith.constant 0 : i32
    %c0_i32_0 = arith.constant 0 : i32
    %c0_i32_1 = arith.constant 0 : i32
    return %arg0, %c0_i32, %c0_i32_0 : i32, i32, i32
  }
  func.func @transform_1(%arg0: i32, %arg1: i32) -> (i32, i32, i32) {
    %c0_i32 = arith.constant 0 : i32
    %c0_i32_0 = arith.constant 0 : i32
    %c0_i32_1 = arith.constant 0 : i32
    return %arg0, %c0_i32, %c0_i32_0 : i32, i32, i32
  }
  func.func @transform_2(%arg0: i32, %arg1: i32) -> (i32, i32) {
    %c0_i32 = arith.constant 0 : i32
    %c0_i32_0 = arith.constant 0 : i32
    %c0_i32_1 = arith.constant 0 : i32
    return %c0_i32, %c0_i32_0 : i32, i32
  }
  func.func @transform_3(%arg0: i32, %arg1: i32) -> (i32, i32) {
    %c0_i32 = arith.constant 0 : i32
    %c0_i32_0 = arith.constant 0 : i32
    %c0_i32_1 = arith.constant 0 : i32
    return %c0_i32, %c0_i32_0 : i32, i32
  }
  func.func @transform_4(%arg0: i32, %arg1: i32) -> (i32, i32, i32) {
    %c0_i32 = arith.constant 0 : i32
    %c0_i32_0 = arith.constant 0 : i32
    %c0_i32_1 = arith.constant 0 : i32
    return %arg1, %c0_i32, %c0_i32_0 : i32, i32, i32
  }
  func.func @transform_5(%arg0: i32, %arg1: i32) -> (i32, i32, i32) {
    %c0_i32 = arith.constant 0 : i32
    %c0_i32_0 = arith.constant 0 : i32
    %c0_i32_1 = arith.constant 0 : i32
    return %arg1, %c0_i32, %c0_i32_0 : i32, i32, i32
  }
  func.func @transform_6(%arg0: i32, %arg1: i32) -> (i32, i32, i32) {
    %c0_i32 = arith.constant 0 : i32
    %c0_i32_0 = arith.constant 0 : i32
    %c0_i32_1 = arith.constant 0 : i32
    return %arg1, %c0_i32, %c0_i32_0 : i32, i32, i32
  }
  func.func @transform_7(%arg0: i32, %arg1: i32) -> (i32, i32, i32) {
    %c0_i32 = arith.constant 0 : i32
    %c0_i32_0 = arith.constant 0 : i32
    %c0_i32_1 = arith.constant 0 : i32
    return %arg1, %c0_i32, %c0_i32_0 : i32, i32, i32
  }
  func.func @transform_8(%arg0: i32, %arg1: i32) -> (i32, i32, i32) {
    %c0_i32 = arith.constant 0 : i32
    %c0_i32_0 = arith.constant 0 : i32
    %c0_i32_1 = arith.constant 0 : i32
    return %arg1, %c0_i32, %c0_i32_0 : i32, i32, i32
  }
  func.func @transform_9(%arg0: i32, %arg1: i32) -> (i32, i32, i32) {
    %c0_i32 = arith.constant 0 : i32
    %c0_i32_0 = arith.constant 0 : i32
    %c0_i32_1 = arith.constant 0 : i32
    return %arg1, %c0_i32, %c0_i32_0 : i32, i32, i32
  }
  func.func @transform_10(%arg0: i32, %arg1: i32) -> (i32, i32, i32) {
    %c0_i32 = arith.constant 0 : i32
    %c0_i32_0 = arith.constant 0 : i32
    %c0_i32_1 = arith.constant 0 : i32
    return %arg1, %c0_i32, %c0_i32_0 : i32, i32, i32
  }
  func.func @transform_11(%arg0: i32, %arg1: i32) -> (i32, i32, i32) {
    %c0_i32 = arith.constant 0 : i32
    %c0_i32_0 = arith.constant 0 : i32
    %c0_i32_1 = arith.constant 0 : i32
    return %arg1, %c0_i32, %c0_i32_0 : i32, i32, i32
  }
  func.func @transform_12(%arg0: i32, %arg1: i32) -> (i32, i32, i32) {
    %c0_i32 = arith.constant 0 : i32
    %c0_i32_0 = arith.constant 0 : i32
    %c0_i32_1 = arith.constant 0 : i32
    return %arg1, %c0_i32, %c0_i32_0 : i32, i32, i32
  }
  func.func @transform_13(%arg0: i32, %arg1: i32) -> (i32, i32, i32) {
    %c0_i32 = arith.constant 0 : i32
    %c0_i32_0 = arith.constant 0 : i32
    %c0_i32_1 = arith.constant 0 : i32
    return %arg1, %c0_i32, %c0_i32_0 : i32, i32, i32
  }
  func.func @transform_14(%arg0: i32, %arg1: i32) -> (i32, i32, i32) {
    %c0_i32 = arith.constant 0 : i32
    %c0_i32_0 = arith.constant 0 : i32
    %c0_i32_1 = arith.constant 0 : i32
    return %arg1, %c0_i32, %c0_i32_0 : i32, i32, i32
  }
  func.func @transform_15(%arg0: i32, %arg1: i32) -> (i32, i32, i32) {
    %c0_i32 = arith.constant 0 : i32
    %c0_i32_0 = arith.constant 0 : i32
    %c0_i32_1 = arith.constant 0 : i32
    return %arg1, %c0_i32, %c0_i32_0 : i32, i32, i32
  }
  func.func @transform_16(%arg0: i32, %arg1: i32) -> (i32, i32) {
    %c0_i32 = arith.constant 0 : i32
    %c0_i32_0 = arith.constant 0 : i32
    %c0_i32_1 = arith.constant 0 : i32
    return %c0_i32, %c0_i32_0 : i32, i32
  }
  func.func @transform_17(%arg0: i32, %arg1: i32) -> (i32, i32) {
    %c0_i32 = arith.constant 0 : i32
    %c0_i32_0 = arith.constant 0 : i32
    %c0_i32_1 = arith.constant 0 : i32
    return %c0_i32, %c0_i32_0 : i32, i32
  }
  func.func @transform_18(%arg0: i32, %arg1: i32) -> (i32, i32, i32) {
    %c0_i32 = arith.constant 0 : i32
    %c0_i32_0 = arith.constant 0 : i32
    %c0_i32_1 = arith.constant 0 : i32
    return %arg0, %c0_i32, %c0_i32_0 : i32, i32, i32
  }
}

</mosaic_0001>

<llo_original>
// kernel: tpu_custom_call.1
$region0: #{tpu_custom_call.1}
  #allocation0 [shape = 'u32[]', space=smem, size = 0x4, offset = 0x4, fixed_abs, tag = 'smem constant byte address 0x4 - core index']
  #allocation1 [shape = 'u32[144,128]{1,0:T(1,128)}', space=vmem, size = 0x12000, scoped, tag = 'internal scratch']
  #allocation2 [shape = 'f32[8,32]{1,0:T(8,128)}', space=vmem, size = 0x1000, scoped, tag = 'scratch operand']
  %s0 = inlined_call_operand.hbm [shape: f32[2,8,32], index: 0, kind: input, shape index: {}]
  %s1 = inlined_call_operand.vmem [shape: f32[2,1,8], index: 1, kind: input, shape index: {}]
  %s2 = inlined_call_operand.vmem [shape: f32[1,32], index: 2, kind: input, shape index: {}]
  %s3 = inlined_call_operand.hbm [shape: f32[1,32], index: 3, kind: input, shape index: {}]
  %s4 = inlined_call_operand.vmem [shape: bf16[2,32,96], index: 4, kind: input, shape index: {}]
  %s5 = inlined_call_operand.vmem [shape: f32[2,1,96], index: 5, kind: input, shape index: {}]
  %s6 = inlined_call_operand.vmem [shape: bf16[2,32,32], index: 6, kind: input, shape index: {}]
  %s7 = inlined_call_operand.vmem [shape: f32[2,1,32], index: 7, kind: input, shape index: {}]
  %s8 = inlined_call_operand.vmem [shape: f32[2,1,32], index: 8, kind: input, shape index: {}]
  %s9 = inlined_call_operand.vmem [shape: f32[2,1,32], index: 9, kind: input, shape index: {}]
  %s10 = inlined_call_operand.vmem [shape: bf16[2,32,64], index: 10, kind: input, shape index: {}]
  %s11 = inlined_call_operand.vmem [shape: f32[2,1,64], index: 11, kind: input, shape index: {}]
  %s12 = inlined_call_operand.vmem [shape: bf16[2,64,32], index: 12, kind: input, shape index: {}]
  %s13 = inlined_call_operand.vmem [shape: f32[2,1,32], index: 13, kind: input, shape index: {}]
  %s14 = inlined_call_operand.vmem [shape: f32[2,1,32], index: 14, kind: input, shape index: {}]
  %s15 = inlined_call_operand.vmem [shape: f32[2,1,32], index: 15, kind: input, shape index: {}]
  %s16 = inlined_call_operand.vmem [shape: bf16[2,32], index: 16, kind: input, shape index: {}]
  %s17 = inlined_call_operand.vmem [shape: f32[2,1], index: 17, kind: input, shape index: {}]
  %s18 = inlined_call_operand.hbm [shape: f32[2,2,8], index: 18, kind: output, shape index: {}]
  %s19 = sld [smem:[#allocation0]]
  $region121: #{tpu_custom_call.1} parent=0
    _
  %s21 = ssub.s32 1, %s19
  %s22 = scalar_select 0, %s21, %s19
  $region1: #{tpu_custom_call.1} parent=0
    #allocation3 [shape = 'u8[8192]{0}', space=vmem, size = 0x2000, scoped, tag = 'input window, operand 0']
    #allocation4 [shape = 's32[2]{0}', space=sflag, size = 0x8, scoped, tag = 'scoped memory for tpu_custom_call.1']
    #allocation5 [shape = 's32[2]{0}', space=sflag, size = 0x8, scoped, tag = 'scoped memory for tpu_custom_call.1']
    #allocation6 [shape = 'u8[512]{0}', space=vmem, size = 0x400, scoped, tag = 'input window, operand 3, single buffered']
    #allocation7 [shape = 's32[1]{0}', space=sflag, size = 0x4, scoped, tag = 'scoped memory for tpu_custom_call.1']
    #allocation8 [shape = 'u8[2048]{0}', space=vmem, size = 0x800, scoped, tag = 'output window, operand 0']
    %23 = vsyncpa [#allocation4], 0
    %s24 = scalar_lea.sflag [#allocation4], 1
    %25 = vsyncpa %s24, 0
    %26 = vsyncpa [#allocation7], 0
    %27 = vsyncpa [#allocation5], 0
    %s28 = scalar_lea.sflag [#allocation5], 1
    %29 = vsyncpa %s28, 0
    loop: start=0, step=1, limit=6
    $region2: #{tpu_custom_call.1} parent=1 // loop_pre_header
      _
    $region3: #{tpu_custom_call.1} parent=1 // loop_header
      %s31 = sphi 0, %s35
      %p32 = scmp.ge.s32.totalorder %s31, 6
      %s38 = sphi 0, %s50
      %s39 = sphi 0, %s46
      %s40 = sphi 0, %s38
      %s41 = sphi 0, %s39
      %s42 = sphi 0, %s40
      %s43 = sphi 0, %s41
      %s53 = sphi 0, %s55
      %s56 = sphi 0, %s53
      %s57 = sphi 0, %s56
      %s73 = sphi 0, %s57
      %s79 = sphi 0, %s81
      %s82 = sphi 0, %s79
      %s83 = sphi 0, %s82
      %s99 = sphi 0, %s83
      %s103 = sphi 0, %s103
      %s105 = sphi 0, %s103
      %s106 = sphi 0, %s105
      %s120 = sphi 0, %s106
      %s124 = sphi 0, %s124
      %s126 = sphi 0, %s124
      %s127 = sphi 0, %s126
      %s141 = sphi 0, %s127
      %s147 = sphi 0, %s149
      %s150 = sphi 0, %s147
      %s151 = sphi 0, %s150
      %s167 = sphi 0, %s151
      %s173 = sphi 0, %s175
      %s176 = sphi 0, %s173
      %s177 = sphi 0, %s176
      %s193 = sphi 0, %s177
      %s199 = sphi 0, %s201
      %s202 = sphi 0, %s199
      %s203 = sphi 0, %s202
      %s219 = sphi 0, %s203
      %s225 = sphi 0, %s227
      %s228 = sphi 0, %s225
      %s229 = sphi 0, %s228
      %s245 = sphi 0, %s229
      %s251 = sphi 0, %s253
      %s254 = sphi 0, %s251
      %s255 = sphi 0, %s254
      %s271 = sphi 0, %s255
      %s277 = sphi 0, %s279
      %s280 = sphi 0, %s277
      %s281 = sphi 0, %s280
      %s297 = sphi 0, %s281
      %s303 = sphi 0, %s305
      %s306 = sphi 0, %s303
      %s307 = sphi 0, %s306
      %s323 = sphi 0, %s307
      %s329 = sphi 0, %s331
      %s332 = sphi 0, %s329
      %s333 = sphi 0, %s332
      %s349 = sphi 0, %s333
      %s355 = sphi 0, %s357
      %s358 = sphi 0, %s355
      %s359 = sphi 0, %s358
      %s375 = sphi 0, %s359
      %s381 = sphi 0, %s383
      %s384 = sphi 0, %s381
      %s385 = sphi 0, %s384
      %s401 = sphi 0, %s385
      %s407 = sphi 0, %s409
      %s410 = sphi 0, %s407
      %s411 = sphi 0, %s410
      %s427 = sphi 0, %s411
      %s433 = sphi 0, %s435
      %s436 = sphi 0, %s433
      %s437 = sphi 0, %s436
      %s453 = sphi 0, %s437
      %s457 = sphi 0, %s457
      %s459 = sphi 0, %s457
      %s460 = sphi 0, %s459
      %s474 = sphi 0, %s460
      %s478 = sphi 0, %s478
      %s480 = sphi 0, %s478
      %s481 = sphi 0, %s480
      %s495 = sphi 0, %s481
      %s501 = sphi 0, %s503
      %s504 = sphi 0, %s501
      %s505 = sphi 0, %s504
      %s521 = sphi 0, %s505
    $region4: #{tpu_custom_call.1} parent=1 // loop_header_branch
      %34 = sbr.rel (%p32) target = $region8
    $region5: #{tpu_custom_call.1} parent=1 // loop_body
      %s36 = ssub.s32 %s31, 1
      %s37 = ssub.s32 %s31, 2
      %s44 = sadd.s32 1, %s39
      %p45 = scmp.ge.s32.totalorder %s44, 2
      %s46 = scalar_select %p45, 0, %s44
      %s47 = sadd.s32 1, %s38
      %s48 = scalar_select %p45, %s47, %s38
      %p49 = scmp.ge.s32.totalorder %s48, 2
      %s50 = scalar_select %p49, 0, %s48
      %s51 = ssub.s32 %s38, %s50
      %p52 = scmp.eq.s32.totalorder %s51, 0
      %s54 = sadd.s32 %s53, 1
      %s55 = scalar_select %p52, %s53, %s54
      %p58 = pneg %p52
      %p59 = scmp.eq.s32.totalorder %s31, 3
      %p60 = por %p58, %p59
      %p61 = scmp.ne.s32.totalorder %s53, %s56
      %p62 = scmp.eq.s32.totalorder %s31, 0
      %p63 = por %p61, %p62
      %p64 = scmp.ne.s32.totalorder %s53, %s56
      %p65 = scmp.eq.s32.totalorder %s36, 3
      %p66 = por %p64, %p65
      %p67 = scmp.ne.s32.totalorder %s56, %s57
      %p68 = scmp.eq.s32.totalorder %s36, 0
      %p69 = por %p67, %p68
      %p70 = scmp.ne.s32.totalorder %s56, %s57
      %p71 = scmp.eq.s32.totalorder %s37, 3
      %p72 = por %p70, %p71
      %p74 = scmp.ne.s32.totalorder %s57, %s73
      %p75 = scmp.eq.s32.totalorder %s37, 0
      %p76 = por %p74, %p75
      %s77 = ssub.s32 %s38, %s50
      %p78 = scmp.eq.s32.totalorder %s77, 0
      %s80 = sadd.s32 %s79, 1
      %s81 = scalar_select %p78, %s79, %s80
      %p84 = pneg %p78
      %p85 = scmp.eq.s32.totalorder %s31, 3
      %p86 = por %p84, %p85
      %p87 = scmp.ne.s32.totalorder %s79, %s82
      %p88 = scmp.eq.s32.totalorder %s31, 0
      %p89 = por %p87, %p88
      %p90 = scmp.ne.s32.totalorder %s79, %s82
      %p91 = scmp.eq.s32.totalorder %s36, 3
      %p92 = por %p90, %p91
      %p93 = scmp.ne.s32.totalorder %s82, %s83
      %p94 = scmp.eq.s32.totalorder %s36, 0
      %p95 = por %p93, %p94
      %p96 = scmp.ne.s32.totalorder %s82, %s83
      %p97 = scmp.eq.s32.totalorder %s37, 3
      %p98 = por %p96, %p97
      %p100 = scmp.ne.s32.totalorder %s83, %s99
      %p101 = scmp.eq.s32.totalorder %s37, 0
      %p102 = por %p100, %p101
      %s104 = sadd.s32 %s103, 1
      %p107 = scmp.eq.s32.totalorder %s31, 3
      %p108 = scmp.ne.s32.totalorder %s103, %s105
      %p109 = scmp.eq.s32.totalorder %s31, 0
      %p110 = por %p108, %p109
      %p111 = scmp.ne.s32.totalorder %s103, %s105
      %p112 = scmp.eq.s32.totalorder %s36, 3
      %p113 = por %p111, %p112
      %p114 = scmp.ne.s32.totalorder %s105, %s106
      %p115 = scmp.eq.s32.totalorder %s36, 0
      %p116 = por %p114, %p115
      %p117 = scmp.ne.s32.totalorder %s105, %s106
      %p118 = scmp.eq.s32.totalorder %s37, 3
      %p119 = por %p117, %p118
      %p121 = scmp.ne.s32.totalorder %s106, %s120
      %p122 = scmp.eq.s32.totalorder %s37, 0
      %p123 = por %p121, %p122
      %s125 = sadd.s32 %s124, 1
      %p128 = scmp.eq.s32.totalorder %s31, 3
      %p129 = scmp.ne.s32.totalorder %s124, %s126
      %p130 = scmp.eq.s32.totalorder %s31, 0
      %p131 = por %p129, %p130
      %p132 = scmp.ne.s32.totalorder %s124, %s126
      %p133 = scmp.eq.s32.totalorder %s36, 3
      %p134 = por %p132, %p133
      %p135 = scmp.ne.s32.totalorder %s126, %s127
      %p136 = scmp.eq.s32.totalorder %s36, 0
      %p137 = por %p135, %p136
      %p138 = scmp.ne.s32.totalorder %s126, %s127
      %p139 = scmp.eq.s32.totalorder %s37, 3
      %p140 = por %p138, %p139
      %p142 = scmp.ne.s32.totalorder %s127, %s141
      %p143 = scmp.eq.s32.totalorder %s37, 0
      %p144 = por %p142, %p143
      %s145 = ssub.s32 %s39, %s46
      %p146 = scmp.eq.s32.totalorder %s145, 0
      %s148 = sadd.s32 %s147, 1
      %s149 = scalar_select %p146, %s147, %s148
      %p152 = pneg %p146
      %p153 = scmp.eq.s32.totalorder %s31, 3
      %p154 = por %p152, %p153
      %p155 = scmp.ne.s32.totalorder %s147, %s150
      %p156 = scmp.eq.s32.totalorder %s31, 0
      %p157 = por %p155, %p156
      %p158 = scmp.ne.s32.totalorder %s147, %s150
      %p159 = scmp.eq.s32.totalorder %s36, 3
      %p160 = por %p158, %p159
      %p161 = scmp.ne.s32.totalorder %s150, %s151
      %p162 = scmp.eq.s32.totalorder %s36, 0
      %p163 = por %p161, %p162
      %p164 = scmp.ne.s32.totalorder %s150, %s151
      %p165 = scmp.eq.s32.totalorder %s37, 3
      %p166 = por %p164, %p165
      %p168 = scmp.ne.s32.totalorder %s151, %s167
      %p169 = scmp.eq.s32.totalorder %s37, 0
      %p170 = por %p168, %p169
      %s171 = ssub.s32 %s39, %s46
      %p172 = scmp.eq.s32.totalorder %s171, 0
      %s174 = sadd.s32 %s173, 1
      %s175 = scalar_select %p172, %s173, %s174
      %p178 = pneg %p172
      %p179 = scmp.eq.s32.totalorder %s31, 3
      %p180 = por %p178, %p179
      %p181 = scmp.ne.s32.totalorder %s173, %s176
      %p182 = scmp.eq.s32.totalorder %s31, 0
      %p183 = por %p181, %p182
      %p184 = scmp.ne.s32.totalorder %s173, %s176
      %p185 = scmp.eq.s32.totalorder %s36, 3
      %p186 = por %p184, %p185
      %p187 = scmp.ne.s32.totalorder %s176, %s177
      %p188 = scmp.eq.s32.totalorder %s36, 0
      %p189 = por %p187, %p188
      %p190 = scmp.ne.s32.totalorder %s176, %s177
      %p191 = scmp.eq.s32.totalorder %s37, 3
      %p192 = por %p190, %p191
      %p194 = scmp.ne.s32.totalorder %s177, %s193
      %p195 = scmp.eq.s32.totalorder %s37, 0
      %p196 = por %p194, %p195
      %s197 = ssub.s32 %s39, %s46
      %p198 = scmp.eq.s32.totalorder %s197, 0
      %s200 = sadd.s32 %s199, 1
      %s201 = scalar_select %p198, %s199, %s200
      %p204 = pneg %p198
      %p205 = scmp.eq.s32.totalorder %s31, 3
      %p206 = por %p204, %p205
      %p207 = scmp.ne.s32.totalorder %s199, %s202
      %p208 = scmp.eq.s32.totalorder %s31, 0
      %p209 = por %p207, %p208
      %p210 = scmp.ne.s32.totalorder %s199, %s202
      %p211 = scmp.eq.s32.totalorder %s36, 3
      %p212 = por %p210, %p211
      %p213 = scmp.ne.s32.totalorder %s202, %s203
      %p214 = scmp.eq.s32.totalorder %s36, 0
      %p215 = por %p213, %p214
      %p216 = scmp.ne.s32.totalorder %s202, %s203
      %p217 = scmp.eq.s32.totalorder %s37, 3
      %p218 = por %p216, %p217
      %p220 = scmp.ne.s32.totalorder %s203, %s219
      %p221 = scmp.eq.s32.totalorder %s37, 0
      %p222 = por %p220, %p221
      %s223 = ssub.s32 %s39, %s46
      %p224 = scmp.eq.s32.totalorder %s223, 0
      %s226 = sadd.s32 %s225, 1
      %s227 = scalar_select %p224, %s225, %s226
      %p230 = pneg %p224
      %p231 = scmp.eq.s32.totalorder %s31, 3
      %p232 = por %p230, %p231
      %p233 = scmp.ne.s32.totalorder %s225, %s228
      %p234 = scmp.eq.s32.totalorder %s31, 0
      %p235 = por %p233, %p234
      %p236 = scmp.ne.s32.totalorder %s225, %s228
      %p237 = scmp.eq.s32.totalorder %s36, 3
      %p238 = por %p236, %p237
      %p239 = scmp.ne.s32.totalorder %s228, %s229
      %p240 = scmp.eq.s32.totalorder %s36, 0
      %p241 = por %p239, %p240
      %p242 = scmp.ne.s32.totalorder %s228, %s229
      %p243 = scmp.eq.s32.totalorder %s37, 3
      %p244 = por %p242, %p243
      %p246 = scmp.ne.s32.totalorder %s229, %s245
      %p247 = scmp.eq.s32.totalorder %s37, 0
      %p248 = por %p246, %p247
      %s249 = ssub.s32 %s39, %s46
      %p250 = scmp.eq.s32.totalorder %s249, 0
      %s252 = sadd.s32 %s251, 1
      %s253 = scalar_select %p250, %s251, %s252
      %p256 = pneg %p250
      %p257 = scmp.eq.s32.totalorder %s31, 3
      %p258 = por %p256, %p257
      %p259 = scmp.ne.s32.totalorder %s251, %s254
      %p260 = scmp.eq.s32.totalorder %s31, 0
      %p261 = por %p259, %p260
      %p262 = scmp.ne.s32.totalorder %s251, %s254
      %p263 = scmp.eq.s32.totalorder %s36, 3
      %p264 = por %p262, %p263
      %p265 = scmp.ne.s32.totalorder %s254, %s255
      %p266 = scmp.eq.s32.totalorder %s36, 0
      %p267 = por %p265, %p266
      %p268 = scmp.ne.s32.totalorder %s254, %s255
      %p269 = scmp.eq.s32.totalorder %s37, 3
      %p270 = por %p268, %p269
      %p272 = scmp.ne.s32.totalorder %s255, %s271
      %p273 = scmp.eq.s32.totalorder %s37, 0
      %p274 = por %p272, %p273
      %s275 = ssub.s32 %s39, %s46
      %p276 = scmp.eq.s32.totalorder %s275, 0
      %s278 = sadd.s32 %s277, 1
      %s279 = scalar_select %p276, %s277, %s278
      %p282 = pneg %p276
      %p283 = scmp.eq.s32.totalorder %s31, 3
      %p284 = por %p282, %p283
      %p285 = scmp.ne.s32.totalorder %s277, %s280
      %p286 = scmp.eq.s32.totalorder %s31, 0
      %p287 = por %p285, %p286
      %p288 = scmp.ne.s32.totalorder %s277, %s280
      %p289 = scmp.eq.s32.totalorder %s36, 3
      %p290 = por %p288, %p289
      %p291 = scmp.ne.s32.totalorder %s280, %s281
      %p292 = scmp.eq.s32.totalorder %s36, 0
      %p293 = por %p291, %p292
      %p294 = scmp.ne.s32.totalorder %s280, %s281
      %p295 = scmp.eq.s32.totalorder %s37, 3
      %p296 = por %p294, %p295
      %p298 = scmp.ne.s32.totalorder %s281, %s297
      %p299 = scmp.eq.s32.totalorder %s37, 0
      %p300 = por %p298, %p299
      %s301 = ssub.s32 %s39, %s46
      %p302 = scmp.eq.s32.totalorder %s301, 0
      %s304 = sadd.s32 %s303, 1
      %s305 = scalar_select %p302, %s303, %s304
      %p308 = pneg %p302
      %p309 = scmp.eq.s32.totalorder %s31, 3
      %p310 = por %p308, %p309
      %p311 = scmp.ne.s32.totalorder %s303, %s306
      %p312 = scmp.eq.s32.totalorder %s31, 0
      %p313 = por %p311, %p312
      %p314 = scmp.ne.s32.totalorder %s303, %s306
      %p315 = scmp.eq.s32.totalorder %s36, 3
      %p316 = por %p314, %p315
      %p317 = scmp.ne.s32.totalorder %s306, %s307
      %p318 = scmp.eq.s32.totalorder %s36, 0
      %p319 = por %p317, %p318
      %p320 = scmp.ne.s32.totalorder %s306, %s307
      %p321 = scmp.eq.s32.totalorder %s37, 3
      %p322 = por %p320, %p321
      %p324 = scmp.ne.s32.totalorder %s307, %s323
      %p325 = scmp.eq.s32.totalorder %s37, 0
      %p326 = por %p324, %p325
      %s327 = ssub.s32 %s39, %s46
      %p328 = scmp.eq.s32.totalorder %s327, 0
      %s330 = sadd.s32 %s329, 1
      %s331 = scalar_select %p328, %s329, %s330
      %p334 = pneg %p328
      %p335 = scmp.eq.s32.totalorder %s31, 3
      %p336 = por %p334, %p335
      %p337 = scmp.ne.s32.totalorder %s329, %s332
      %p338 = scmp.eq.s32.totalorder %s31, 0
      %p339 = por %p337, %p338
      %p340 = scmp.ne.s32.totalorder %s329, %s332
      %p341 = scmp.eq.s32.totalorder %s36, 3
      %p342 = por %p340, %p341
      %p343 = scmp.ne.s32.totalorder %s332, %s333
      %p344 = scmp.eq.s32.totalorder %s36, 0
      %p345 = por %p343, %p344
      %p346 = scmp.ne.s32.totalorder %s332, %s333
      %p347 = scmp.eq.s32.totalorder %s37, 3
      %p348 = por %p346, %p347
      %p350 = scmp.ne.s32.totalorder %s333, %s349
      %p351 = scmp.eq.s32.totalorder %s37, 0
      %p352 = por %p350, %p351
      %s353 = ssub.s32 %s39, %s46
      %p354 = scmp.eq.s32.totalorder %s353, 0
      %s356 = sadd.s32 %s355, 1
      %s357 = scalar_select %p354, %s355, %s356
      %p360 = pneg %p354
      %p361 = scmp.eq.s32.totalorder %s31, 3
      %p362 = por %p360, %p361
      %p363 = scmp.ne.s32.totalorder %s355, %s358
      %p364 = scmp.eq.s32.totalorder %s31, 0
      %p365 = por %p363, %p364
      %p366 = scmp.ne.s32.totalorder %s355, %s358
      %p367 = scmp.eq.s32.totalorder %s36, 3
      %p368 = por %p366, %p367
      %p369 = scmp.ne.s32.totalorder %s358, %s359
      %p370 = scmp.eq.s32.totalorder %s36, 0
      %p371 = por %p369, %p370
      %p372 = scmp.ne.s32.totalorder %s358, %s359
      %p373 = scmp.eq.s32.totalorder %s37, 3
      %p374 = por %p372, %p373
      %p376 = scmp.ne.s32.totalorder %s359, %s375
      %p377 = scmp.eq.s32.totalorder %s37, 0
      %p378 = por %p376, %p377
      %s379 = ssub.s32 %s39, %s46
      %p380 = scmp.eq.s32.totalorder %s379, 0
      %s382 = sadd.s32 %s381, 1
      %s383 = scalar_select %p380, %s381, %s382
      %p386 = pneg %p380
      %p387 = scmp.eq.s32.totalorder %s31, 3
      %p388 = por %p386, %p387
      %p389 = scmp.ne.s32.totalorder %s381, %s384
      %p390 = scmp.eq.s32.totalorder %s31, 0
      %p391 = por %p389, %p390
      %p392 = scmp.ne.s32.totalorder %s381, %s384
      %p393 = scmp.eq.s32.totalorder %s36, 3
      %p394 = por %p392, %p393
      %p395 = scmp.ne.s32.totalorder %s384, %s385
      %p396 = scmp.eq.s32.totalorder %s36, 0
      %p397 = por %p395, %p396
      %p398 = scmp.ne.s32.totalorder %s384, %s385
      %p399 = scmp.eq.s32.totalorder %s37, 3
      %p400 = por %p398, %p399
      %p402 = scmp.ne.s32.totalorder %s385, %s401
      %p403 = scmp.eq.s32.totalorder %s37, 0
      %p404 = por %p402, %p403
      %s405 = ssub.s32 %s39, %s46
      %p406 = scmp.eq.s32.totalorder %s405, 0
      %s408 = sadd.s32 %s407, 1
      %s409 = scalar_select %p406, %s407, %s408
      %p412 = pneg %p406
      %p413 = scmp.eq.s32.totalorder %s31, 3
      %p414 = por %p412, %p413
      %p415 = scmp.ne.s32.totalorder %s407, %s410
      %p416 = scmp.eq.s32.totalorder %s31, 0
      %p417 = por %p415, %p416
      %p418 = scmp.ne.s32.totalorder %s407, %s410
      %p419 = scmp.eq.s32.totalorder %s36, 3
      %p420 = por %p418, %p419
      %p421 = scmp.ne.s32.totalorder %s410, %s411
      %p422 = scmp.eq.s32.totalorder %s36, 0
      %p423 = por %p421, %p422
      %p424 = scmp.ne.s32.totalorder %s410, %s411
      %p425 = scmp.eq.s32.totalorder %s37, 3
      %p426 = por %p424, %p425
      %p428 = scmp.ne.s32.totalorder %s411, %s427
      %p429 = scmp.eq.s32.totalorder %s37, 0
      %p430 = por %p428, %p429
      %s431 = ssub.s32 %s39, %s46
      %p432 = scmp.eq.s32.totalorder %s431, 0
      %s434 = sadd.s32 %s433, 1
      %s435 = scalar_select %p432, %s433, %s434
      %p438 = pneg %p432
      %p439 = scmp.eq.s32.totalorder %s31, 3
      %p440 = por %p438, %p439
      %p441 = scmp.ne.s32.totalorder %s433, %s436
      %p442 = scmp.eq.s32.totalorder %s31, 0
      %p443 = por %p441, %p442
      %p444 = scmp.ne.s32.totalorder %s433, %s436
      %p445 = scmp.eq.s32.totalorder %s36, 3
      %p446 = por %p444, %p445
      %p447 = scmp.ne.s32.totalorder %s436, %s437
      %p448 = scmp.eq.s32.totalorder %s36, 0
      %p449 = por %p447, %p448
      %p450 = scmp.ne.s32.totalorder %s436, %s437
      %p451 = scmp.eq.s32.totalorder %s37, 3
      %p452 = por %p450, %p451
      %p454 = scmp.ne.s32.totalorder %s437, %s453
      %p455 = scmp.eq.s32.totalorder %s37, 0
      %p456 = por %p454, %p455
      %s458 = sadd.s32 %s457, 1
      %p461 = scmp.eq.s32.totalorder %s31, 3
      %p462 = scmp.ne.s32.totalorder %s457, %s459
      %p463 = scmp.eq.s32.totalorder %s31, 0
      %p464 = por %p462, %p463
      %p465 = scmp.ne.s32.totalorder %s457, %s459
      %p466 = scmp.eq.s32.totalorder %s36, 3
      %p467 = por %p465, %p466
      %p468 = scmp.ne.s32.totalorder %s459, %s460
      %p469 = scmp.eq.s32.totalorder %s36, 0
      %p470 = por %p468, %p469
      %p471 = scmp.ne.s32.totalorder %s459, %s460
      %p472 = scmp.eq.s32.totalorder %s37, 3
      %p473 = por %p471, %p472
      %p475 = scmp.ne.s32.totalorder %s460, %s474
      %p476 = scmp.eq.s32.totalorder %s37, 0
      %p477 = por %p475, %p476
      %s479 = sadd.s32 %s478, 1
      %p482 = scmp.eq.s32.totalorder %s31, 3
      %p483 = scmp.ne.s32.totalorder %s478, %s480
      %p484 = scmp.eq.s32.totalorder %s31, 0
      %p485 = por %p483, %p484
      %p486 = scmp.ne.s32.totalorder %s478, %s480
      %p487 = scmp.eq.s32.totalorder %s36, 3
      %p488 = por %p486, %p487
      %p489 = scmp.ne.s32.totalorder %s480, %s481
      %p490 = scmp.eq.s32.totalorder %s36, 0
      %p491 = por %p489, %p490
      %p492 = scmp.ne.s32.totalorder %s480, %s481
      %p493 = scmp.eq.s32.totalorder %s37, 3
      %p494 = por %p492, %p493
      %p496 = scmp.ne.s32.totalorder %s481, %s495
      %p497 = scmp.eq.s32.totalorder %s37, 0
      %p498 = por %p496, %p497
      %s499 = ssub.s32 %s38, %s50
      %p500 = scmp.eq.s32.totalorder %s499, 0
      %s502 = sadd.s32 %s501, 1
      %s503 = scalar_select %p500, %s501, %s502
      %p506 = pneg %p500
      %p507 = scmp.eq.s32.totalorder %s31, 3
      %p508 = por %p506, %p507
      %p509 = scmp.ne.s32.totalorder %s501, %s504
      %p510 = scmp.eq.s32.totalorder %s31, 0
      %p511 = por %p509, %p510
      %p512 = scmp.ne.s32.totalorder %s501, %s504
      %p513 = scmp.eq.s32.totalorder %s36, 3
      %p514 = por %p512, %p513
      %p515 = scmp.ne.s32.totalorder %s504, %s505
      %p516 = scmp.eq.s32.totalorder %s36, 0
      %p517 = por %p515, %p516
      %p518 = scmp.ne.s32.totalorder %s504, %s505
      %p519 = scmp.eq.s32.totalorder %s37, 3
      %p520 = por %p518, %p519
      %p522 = scmp.ne.s32.totalorder %s505, %s521
      %p523 = scmp.eq.s32.totalorder %s37, 0
      %p524 = por %p522, %p523
      %p525 = scmp.le.s32.totalorder 1, %s31
      %p526 = scmp.lt.s32.totalorder %s31, 5
      %p527 = pnand %p525, %p526
      %p528 = pneg %p527
      // Predicated region
      $region9: #{tpu_custom_call.1} parent=5 // pred_check
        _
      $region10: #{tpu_custom_call.1} parent=5 // pred_check_branch
        %530 = sbr.rel (%p527) target = $region12
      $region11: #{tpu_custom_call.1} parent=5 // pred_region
        %s531 = ssub.s32 %s31, 1
        // Predicated region
        $region13: #{tpu_custom_call.1} parent=11 // pred_check
          %p532 = pneg %p116
        $region14: #{tpu_custom_call.1} parent=11 // pred_check_branch
          %534 = sbr.rel (%p532) target = $region16
        $region15: #{tpu_custom_call.1} parent=11 // pred_region
          _
        $region16: #{tpu_custom_call.1} parent=11 // pred_fallthru
          _
        // Predicated region
        $region17: #{tpu_custom_call.1} parent=11 // pred_check
          %p535 = pneg %p137
        $region18: #{tpu_custom_call.1} parent=11 // pred_check_branch
          %537 = sbr.rel (%p535) target = $region20
        $region19: #{tpu_custom_call.1} parent=11 // pred_region
          %s539 = ssub.s32 16, 16
          %540 = vsyncadd [#allocation7], %s539
          %s542 = sshll.u32 [#allocation6], 4
          %s543 = int_to_ptr.vmem [resolvable:$true] %s542
          %545 = dma.hbm_to_vmem [thread:$0]  %s3, 16, %s543, [#allocation7]
        $region20: #{tpu_custom_call.1} parent=11 // pred_fallthru
          _
        // Predicated region
        $region21: #{tpu_custom_call.1} parent=11 // pred_check
          %p546 = pneg %p470
        $region22: #{tpu_custom_call.1} parent=11 // pred_check_branch
          %548 = sbr.rel (%p546) target = $region24
        $region23: #{tpu_custom_call.1} parent=11 // pred_region
          _
        $region24: #{tpu_custom_call.1} parent=11 // pred_fallthru
          _
        // Predicated region
        $region25: #{tpu_custom_call.1} parent=11 // pred_check
          %p549 = pneg %p491
        $region26: #{tpu_custom_call.1} parent=11 // pred_check_branch
          %551 = sbr.rel (%p549) target = $region28
        $region27: #{tpu_custom_call.1} parent=11 // pred_region
          _
        $region28: #{tpu_custom_call.1} parent=11 // pred_fallthru
          _
      $region12: #{tpu_custom_call.1} parent=5 // pred_fallthru
        _
      %p552 = scmp.lt.s32.totalorder %s31, 4
      // Predicated region
      $region29: #{tpu_custom_call.1} parent=5 // pred_check
        %p553 = pneg %p552
      $region30: #{tpu_custom_call.1} parent=5 // pred_check_branch
        %555 = sbr.rel (%p553) target = $region32
      $region31: #{tpu_custom_call.1} parent=5 // pred_region
        // Predicated region
        $region33: #{tpu_custom_call.1} parent=31 // pred_check
          %p556 = pneg %p63
        $region34: #{tpu_custom_call.1} parent=31 // pred_check_branch
          %558 = sbr.rel (%p556) target = $region36
        $region35: #{tpu_custom_call.1} parent=31 // pred_region
          %s559 = sand.u32 %s53, 1
          %s560 = scalar_lea.sflag [#allocation4], %s559
          %s561 = sand.u32 %s53, 1
          %s562 = smul.addr %s561, 8
          %s563 = scalar_lea.vmem [#allocation3], %s562
          %s565 = ssub.s32 128, 128
          %566 = vsyncadd %s560, %s565
          %s567 = smul.addr %s38, 128
          %s568 = scalar_lea.hbm %s0, %s567
          %s570 = sshll.u32 %s563, 4
          %s571 = int_to_ptr.vmem [resolvable:$true] %s570
          %573 = dma.hbm_to_vmem [thread:$0]  %s568, 128, %s571, %s560
        $region36: #{tpu_custom_call.1} parent=31 // pred_fallthru
          _
        // Predicated region
        $region37: #{tpu_custom_call.1} parent=31 // pred_check
          %p574 = pneg %p89
        $region38: #{tpu_custom_call.1} parent=31 // pred_check_branch
          %576 = sbr.rel (%p574) target = $region40
        $region39: #{tpu_custom_call.1} parent=31 // pred_region
          %p577 = scmp.lt.s32.totalorder %s38, 1
          %s578 = scalar_select %p577, %s38, 1
          %s579 = scalar_lea.vmem %s1, %s578
        $region40: #{tpu_custom_call.1} parent=31 // pred_fallthru
          _
        // Predicated region
        $region41: #{tpu_custom_call.1} parent=31 // pred_check
          %p580 = pneg %p157
        $region42: #{tpu_custom_call.1} parent=31 // pred_check_branch
          %582 = sbr.rel (%p580) target = $region44
        $region43: #{tpu_custom_call.1} parent=31 // pred_region
          %p583 = scmp.lt.s32.totalorder %s39, 1
          %s584 = scalar_select %p583, %s39, 1
          %s585 = smul.addr %s584, 4
          %s586 = smul.addr %s585, 4
          %s587 = scalar_lea.vmem %s4, %s586
        $region44: #{tpu_custom_call.1} parent=31 // pred_fallthru
          _
        // Predicated region
        $region45: #{tpu_custom_call.1} parent=31 // pred_check
          %p588 = pneg %p183
        $region46: #{tpu_custom_call.1} parent=31 // pred_check_branch
          %590 = sbr.rel (%p588) target = $region48
        $region47: #{tpu_custom_call.1} parent=31 // pred_region
          %p591 = scmp.lt.s32.totalorder %s39, 1
          %s592 = scalar_select %p591, %s39, 1
          %s593 = scalar_lea.vmem %s5, %s592
        $region48: #{tpu_custom_call.1} parent=31 // pred_fallthru
          _
        // Predicated region
        $region49: #{tpu_custom_call.1} parent=31 // pred_check
          %p594 = pneg %p209
        $region50: #{tpu_custom_call.1} parent=31 // pred_check_branch
          %596 = sbr.rel (%p594) target = $region52
        $region51: #{tpu_custom_call.1} parent=31 // pred_region
          %p597 = scmp.lt.s32.totalorder %s39, 1
          %s598 = scalar_select %p597, %s39, 1
          %s599 = smul.addr %s598, 4
          %s600 = smul.addr %s599, 4
          %s601 = scalar_lea.vmem %s6, %s600
        $region52: #{tpu_custom_call.1} parent=31 // pred_fallthru
          _
        // Predicated region
        $region53: #{tpu_custom_call.1} parent=31 // pred_check
          %p602 = pneg %p235
        $region54: #{tpu_custom_call.1} parent=31 // pred_check_branch
          %604 = sbr.rel (%p602) target = $region56
        $region55: #{tpu_custom_call.1} parent=31 // pred_region
          %p605 = scmp.lt.s32.totalorder %s39, 1
          %s606 = scalar_select %p605, %s39, 1
          %s607 = scalar_lea.vmem %s7, %s606
        $region56: #{tpu_custom_call.1} parent=31 // pred_fallthru
          _
        // Predicated region
        $region57: #{tpu_custom_call.1} parent=31 // pred_check
          %p608 = pneg %p261
        $region58: #{tpu_custom_call.1} parent=31 // pred_check_branch
          %610 = sbr.rel (%p608) target = $region60
        $region59: #{tpu_custom_call.1} parent=31 // pred_region
          %p611 = scmp.lt.s32.totalorder %s39, 1
          %s612 = scalar_select %p611, %s39, 1
          %s613 = scalar_lea.vmem %s8, %s612
        $region60: #{tpu_custom_call.1} parent=31 // pred_fallthru
          _
        // Predicated region
        $region61: #{tpu_custom_call.1} parent=31 // pred_check
          %p614 = pneg %p287
        $region62: #{tpu_custom_call.1} parent=31 // pred_check_branch
          %616 = sbr.rel (%p614) target = $region64
        $region63: #{tpu_custom_call.1} parent=31 // pred_region
          %p617 = scmp.lt.s32.totalorder %s39, 1
          %s618 = scalar_select %p617, %s39, 1
          %s619 = scalar_lea.vmem %s9, %s618
        $region64: #{tpu_custom_call.1} parent=31 // pred_fallthru
          _
        // Predicated region
        $region65: #{tpu_custom_call.1} parent=31 // pred_check
          %p620 = pneg %p313
        $region66: #{tpu_custom_call.1} parent=31 // pred_check_branch
          %622 = sbr.rel (%p620) target = $region68
        $region67: #{tpu_custom_call.1} parent=31 // pred_region
          %p623 = scmp.lt.s32.totalorder %s39, 1
          %s624 = scalar_select %p623, %s39, 1
          %s625 = smul.addr %s624, 4
          %s626 = smul.addr %s625, 4
          %s627 = scalar_lea.vmem %s10, %s626
        $region68: #{tpu_custom_call.1} parent=31 // pred_fallthru
          _
        // Predicated region
        $region69: #{tpu_custom_call.1} parent=31 // pred_check
          %p628 = pneg %p339
        $region70: #{tpu_custom_call.1} parent=31 // pred_check_branch
          %630 = sbr.rel (%p628) target = $region72
        $region71: #{tpu_custom_call.1} parent=31 // pred_region
          %p631 = scmp.lt.s32.totalorder %s39, 1
          %s632 = scalar_select %p631, %s39, 1
          %s633 = scalar_lea.vmem %s11, %s632
        $region72: #{tpu_custom_call.1} parent=31 // pred_fallthru
          _
        // Predicated region
        $region73: #{tpu_custom_call.1} parent=31 // pred_check
          %p634 = pneg %p365
        $region74: #{tpu_custom_call.1} parent=31 // pred_check_branch
          %636 = sbr.rel (%p634) target = $region76
        $region75: #{tpu_custom_call.1} parent=31 // pred_region
          %p637 = scmp.lt.s32.totalorder %s39, 1
          %s638 = scalar_select %p637, %s39, 1
          %s639 = smul.addr %s638, 8
          %s640 = smul.addr %s639, 4
          %s641 = scalar_lea.vmem %s12, %s640
        $region76: #{tpu_custom_call.1} parent=31 // pred_fallthru
          _
        // Predicated region
        $region77: #{tpu_custom_call.1} parent=31 // pred_check
          %p642 = pneg %p391
        $region78: #{tpu_custom_call.1} parent=31 // pred_check_branch
          %644 = sbr.rel (%p642) target = $region80
        $region79: #{tpu_custom_call.1} parent=31 // pred_region
          %p645 = scmp.lt.s32.totalorder %s39, 1
          %s646 = scalar_select %p645, %s39, 1
          %s647 = scalar_lea.vmem %s13, %s646
        $region80: #{tpu_custom_call.1} parent=31 // pred_fallthru
          _
        // Predicated region
        $region81: #{tpu_custom_call.1} parent=31 // pred_check
          %p648 = pneg %p417
        $region82: #{tpu_custom_call.1} parent=31 // pred_check_branch
          %650 = sbr.rel (%p648) target = $region84
        $region83: #{tpu_custom_call.1} parent=31 // pred_region
          %p651 = scmp.lt.s32.totalorder %s39, 1
          %s652 = scalar_select %p651, %s39, 1
          %s653 = scalar_lea.vmem %s14, %s652
        $region84: #{tpu_custom_call.1} parent=31 // pred_fallthru
          _
        // Predicated region
        $region85: #{tpu_custom_call.1} parent=31 // pred_check
          %p654 = pneg %p443
        $region86: #{tpu_custom_call.1} parent=31 // pred_check_branch
          %656 = sbr.rel (%p654) target = $region88
        $region87: #{tpu_custom_call.1} parent=31 // pred_region
          %p657 = scmp.lt.s32.totalorder %s39, 1
          %s658 = scalar_select %p657, %s39, 1
          %s659 = scalar_lea.vmem %s15, %s658
        $region88: #{tpu_custom_call.1} parent=31 // pred_fallthru
          _
      $region32: #{tpu_custom_call.1} parent=5 // pred_fallthru
        _
      %p660 = scmp.le.s32.totalorder 1, %s31
      %p661 = scmp.lt.s32.totalorder %s31, 5
      %p662 = pnand %p660, %p661
      %p663 = pneg %p662
      // Predicated region
      $region89: #{tpu_custom_call.1} parent=5 // pred_check
        _
      $region90: #{tpu_custom_call.1} parent=5 // pred_check_branch
        %665 = sbr.rel (%p662) target = $region92
      $region91: #{tpu_custom_call.1} parent=5 // pred_region
        %s666 = ssub.s32 %s31, 1
        %s667 = sand.u32 %s56, 1
        %s668 = scalar_lea.sflag [#allocation4], %s667
        %s669 = sand.u32 %s56, 1
        %s670 = smul.addr %s669, 8
        %s671 = scalar_lea.vmem [#allocation3], %s670
        // Predicated region
        $region93: #{tpu_custom_call.1} parent=91 // pred_check
          %p672 = pneg %p69
        $region94: #{tpu_custom_call.1} parent=91 // pred_check_branch
          %674 = sbr.rel (%p672) target = $region96
        $region95: #{tpu_custom_call.1} parent=91 // pred_region
          %675 = dma.done %s668, 128
        $region96: #{tpu_custom_call.1} parent=91 // pred_fallthru
          _
        // Predicated region
        $region97: #{tpu_custom_call.1} parent=91 // pred_check
          %p676 = pneg %p137
        $region98: #{tpu_custom_call.1} parent=91 // pred_check_branch
          %678 = sbr.rel (%p676) target = $region100
        $region99: #{tpu_custom_call.1} parent=91 // pred_region
          %679 = dma.done [#allocation7], 16
        $region100: #{tpu_custom_call.1} parent=91 // pred_fallthru
          _
        %s680 = sand.u32 %s56, 1
        %s681 = scalar_lea.sflag [#allocation4], %s680
        %s682 = sand.u32 %s56, 1
        %s683 = smul.addr %s682, 8
        %s684 = scalar_lea.vmem [#allocation3], %s683
        %p685 = pneg %p69
        %p686 = pneg %p66
        %p687 = scmp.lt.s32.totalorder %s40, 1
        %s688 = scalar_select %p687, %s40, 1
        %s689 = scalar_lea.vmem %s1, %s688
        %p690 = pneg %p95
        %p691 = pneg %p92
        %p692 = pneg %p116
        %p693 = pneg %p113
        %p694 = pneg %p137
        %p695 = pneg %p134
        %p696 = scmp.lt.s32.totalorder %s41, 1
        %s697 = scalar_select %p696, %s41, 1
        %s698 = smul.addr %s697, 4
        %s699 = smul.addr %s698, 4
        %s700 = scalar_lea.vmem %s4, %s699
        %p701 = pneg %p163
        %p702 = pneg %p160
        %p703 = scmp.lt.s32.totalorder %s41, 1
        %s704 = scalar_select %p703, %s41, 1
        %s705 = scalar_lea.vmem %s5, %s704
        %p706 = pneg %p189
        %p707 = pneg %p186
        %p708 = scmp.lt.s32.totalorder %s41, 1
        %s709 = scalar_select %p708, %s41, 1
        %s710 = smul.addr %s709, 4
        %s711 = smul.addr %s710, 4
        %s712 = scalar_lea.vmem %s6, %s711
        %p713 = pneg %p215
        %p714 = pneg %p212
        %p715 = scmp.lt.s32.totalorder %s41, 1
        %s716 = scalar_select %p715, %s41, 1
        %s717 = scalar_lea.vmem %s7, %s716
        %p718 = pneg %p241
        %p719 = pneg %p238
        %p720 = scmp.lt.s32.totalorder %s41, 1
        %s721 = scalar_select %p720, %s41, 1
        %s722 = scalar_lea.vmem %s8, %s721
        %p723 = pneg %p267
        %p724 = pneg %p264
        %p725 = scmp.lt.s32.totalorder %s41, 1
        %s726 = scalar_select %p725, %s41, 1
        %s727 = scalar_lea.vmem %s9, %s726
        %p728 = pneg %p293
        %p729 = pneg %p290
        %p730 = scmp.lt.s32.totalorder %s41, 1
        %s731 = scalar_select %p730, %s41, 1
        %s732 = smul.addr %s731, 4
        %s733 = smul.addr %s732, 4
        %s734 = scalar_lea.vmem %s10, %s733
        %p735 = pneg %p319
        %p736 = pneg %p316
        %p737 = scmp.lt.s32.totalorder %s41, 1
        %s738 = scalar_select %p737, %s41, 1
        %s739 = scalar_lea.vmem %s11, %s738
        %p740 = pneg %p345
        %p741 = pneg %p342
        %p742 = scmp.lt.s32.totalorder %s41, 1
        %s743 = scalar_select %p742, %s41, 1
        %s744 = smul.addr %s743, 8
        %s745 = smul.addr %s744, 4
        %s746 = scalar_lea.vmem %s12, %s745
        %p747 = pneg %p371
        %p748 = pneg %p368
        %p749 = scmp.lt.s32.totalorder %s41, 1
        %s750 = scalar_select %p749, %s41, 1
        %s751 = scalar_lea.vmem %s13, %s750
        %p752 = pneg %p397
        %p753 = pneg %p394
        %p754 = scmp.lt.s32.totalorder %s41, 1
        %s755 = scalar_select %p754, %s41, 1
        %s756 = scalar_lea.vmem %s14, %s755
        %p757 = pneg %p423
        %p758 = pneg %p420
        %p759 = scmp.lt.s32.totalorder %s41, 1
        %s760 = scalar_select %p759, %s41, 1
        %s761 = scalar_lea.vmem %s15, %s760
        %p762 = pneg %p449
        %p763 = pneg %p446
        %p764 = pneg %p470
        %p765 = pneg %p467
        %p766 = pneg %p491
        %p767 = pneg %p488
        %p768 = pneg %p517
        %p769 = pneg %p514
        %s770 = sand.u32 %s504, 1
        %s771 = scalar_lea.sflag [#allocation5], %s770
        %s772 = sand.u32 %s504, 1
        %s773 = smul.addr %s772, 2
        %s774 = scalar_lea.vmem [#allocation8], %s773
        %p775 = scmp.lt.s32.totalorder %s40, 1
        %s776 = scalar_select %p775, %s40, 1
        %s777 = scalar_lea.vmem %s1, %s776
        %p778 = scmp.lt.s32.totalorder %s41, 1
        %s779 = scalar_select %p778, %s41, 1
        %s780 = smul.addr %s779, 4
        %s781 = smul.addr %s780, 4
        %s782 = scalar_lea.vmem %s4, %s781
        %p783 = scmp.lt.s32.totalorder %s41, 1
        %s784 = scalar_select %p783, %s41, 1
        %s785 = scalar_lea.vmem %s5, %s784
        %p786 = scmp.lt.s32.totalorder %s41, 1
        %s787 = scalar_select %p786, %s41, 1
        %s788 = smul.addr %s787, 4
        %s789 = smul.addr %s788, 4
        %s790 = scalar_lea.vmem %s6, %s789
        %p791 = scmp.lt.s32.totalorder %s41, 1
        %s792 = scalar_select %p791, %s41, 1
        %s793 = scalar_lea.vmem %s7, %s792
        %p794 = scmp.lt.s32.totalorder %s41, 1
        %s795 = scalar_select %p794, %s41, 1
        %s796 = scalar_lea.vmem %s8, %s795
        %p797 = scmp.lt.s32.totalorder %s41, 1
        %s798 = scalar_select %p797, %s41, 1
        %s799 = scalar_lea.vmem %s9, %s798
        %p800 = scmp.lt.s32.totalorder %s41, 1
        %s801 = scalar_select %p800, %s41, 1
        %s802 = smul.addr %s801, 4
        %s803 = smul.addr %s802, 4
        %s804 = scalar_lea.vmem %s10, %s803
        %p805 = scmp.lt.s32.totalorder %s41, 1
        %s806 = scalar_select %p805, %s41, 1
        %s807 = scalar_lea.vmem %s11, %s806
        %p808 = scmp.lt.s32.totalorder %s41, 1
        %s809 = scalar_select %p808, %s41, 1
        %s810 = smul.addr %s809, 8
        %s811 = smul.addr %s810, 4
        %s812 = scalar_lea.vmem %s12, %s811
        %p813 = scmp.lt.s32.totalorder %s41, 1
        %s814 = scalar_select %p813, %s41, 1
        %s815 = scalar_lea.vmem %s13, %s814
        %p816 = scmp.lt.s32.totalorder %s41, 1
        %s817 = scalar_select %p816, %s41, 1
        %s818 = scalar_lea.vmem %s14, %s817
        %p819 = scmp.lt.s32.totalorder %s41, 1
        %s820 = scalar_select %p819, %s41, 1
        %s821 = scalar_lea.vmem %s15, %s820
        %p823 = scmp.eq.s32.totalorder %s41, 0
        // Predicated region
        $region101: #{tpu_custom_call.1} parent=91 // pred_check
          %p824 = pneg %p823
        $region102: #{tpu_custom_call.1} parent=91 // pred_check_branch
          %826 = sbr.rel (%p824) target = $region104
        $region103: #{tpu_custom_call.1} parent=91 // pred_region
          %v827 = vld [vmem:[%s671] sm:$0xff]
          %v828 = vld [vmem:[%s2] sm:$0x1]
          %v829 = vld [vmem:[#allocation6] sm:$0x1]
          %vm830 = vcmask 261120
          %v831 = vsel %vm830, %v827, 0.0
          %832 = vadd.xlane.f32.xlu0 %v831
          %v833 = vpop.xlane.xlu0 %832
          %v834 = vrcp.pop 32.0
          %v835 = vmul.f32 %v833, %v834
          %v836 = vsub.f32 %v827, %v835
          %v837 = vmul.f32 %v836, %v836
          %v838 = vsel %vm830, %v837, 0.0
          %839 = vadd.xlane.f32.xlu0 %v838
          %v840 = vpop.xlane.xlu0 %839
          %v841 = vmul.f32 %v840, %v834
          %v842 = vadd.f32 %v841, 1e-12
          %v843 = vrsqrt.pop %v842
          %v844 = vmul.f32 %v836, %v843
          %v846 = vlaneseq
          %v847 = vshrl.u32 %v846, 7
          %v848 = vsub.s32 0, %v847
          %v849 = vrot.slane %v828, %v848
          %v851 = vmul.f32 %v844, %v849
          %v853 = vlaneseq
          %v854 = vshrl.u32 %v853, 7
          %v855 = vsub.s32 0, %v854
          %v856 = vrot.slane %v829, %v855
          %v858 = vadd.f32 %v851, %v856
          %859 = vst.msk [vmem:[#allocation2] sm:$0xff] %vm830, %v858
        $region104: #{tpu_custom_call.1} parent=91 // pred_fallthru
          _
        %v860 = vld [vmem:[#allocation2] sm:$0xff]
        %v861 = vpack.c.bf16 %v860, %v860
        %v862 = vld [vmem:[%s777] sm:$0x1]
        %v864 = vlaneseq
        %v865 = vshrl.u32 %v864, 7
        %v866 = vsub.s32 0, %v865
        %v867 = vrot.slane %v862, %v866
        %v869 = vld [vmem:[%s782] sm:$0xf]
        %v870 = vld [vmem:[%s782 + $0x4] sm:$0xf]
        %v871 = vld [vmem:[%s782 + $0x8] sm:$0xf]
        %v872 = vld [vmem:[%s782 + $0xc] sm:$0xf]
        %v873 = vld [vmem:[%s785] sm:$0x1]
        %v875 = vlaneseq
        %v876 = vshrl.u32 %v875, 7
        %v877 = vsub.s32 0, %v876
        %v878 = vrot.slane %v873, %v877
        %v884 = vunpack.c.l.b16 %v869
        %v885 = vunpack.c.l.b16 %v870
        %v886 = vunpack.c.l.b16 %v871
        %v887 = vunpack.c.l.b16 %v872
        %v888 = vpack.c.b16 %v885, %v884
        %v889 = vpack.c.b16 %v887, %v886
        %vm892 = vcmask 261120
        %v894 = vsel %vm892, %v861, 0
        %896 = vmatprep.subr.bf16.mxu0 0
        %897 = vmatpush1.bf16.msra.mxu0 %v888
        %898 = vmatprep.subr.bf16.mxu0 0
        %899 = vmatpush1.bf16.msra.mxu0 %v889
        %900 = vmatprep.subr.bf16.mxu0 0
        %901 = vmatpush1.bf16.msra.mxu0 0
        %902 = vmatprep.subr.bf16.mxu0 0
        %903 = vmatpush1.bf16.msra.mxu0 0
        %904 = vmatprep.subr.bf16.mxu0 0
        %905 = vmatpush1.bf16.msra.mxu0 0
        %906 = vmatprep.subr.bf16.mxu0 0
        %907 = vmatpush1.bf16.msra.mxu0 0
        %908 = vmatprep.subr.bf16.mxu0 0
        %909 = vmatpush1.bf16.msra.mxu0 0
        %910 = vmatprep.subr.bf16.mxu0 0
        %911 = vmatpush1.bf16.msra.mxu0 0
        %912 = vmatprep.subr.bf16.mxu0 0
        %913 = vmatpush1.bf16.msra.mxu0 0
        %914 = vmatprep.subr.bf16.mxu0 0
        %915 = vmatpush1.bf16.msra.mxu0 0
        %916 = vmatprep.subr.bf16.mxu0 0
        %917 = vmatpush1.bf16.msra.mxu0 0
        %918 = vmatprep.subr.bf16.mxu0 0
        %919 = vmatpush1.bf16.msra.mxu0 0
        %920 = vmatprep.subr.bf16.mxu0 0
        %921 = vmatpush1.bf16.msra.mxu0 0
        %922 = vmatprep.subr.bf16.mxu0 0
        %923 = vmatpush1.bf16.msra.mxu0 0
        %924 = vmatprep.subr.bf16.mxu0 0
        %925 = vmatpush1.bf16.msra.mxu0 0
        %926 = vmatprep.subr.bf16.mxu0 0
        %927 = vmatpush1.bf16.msra.mxu0 0
        %928 = vmatprep.mubr.bf16.mxu0 0
        %929 = vmatmul.mubr.bf16.gmra.mrb[0].mxu0 %v894
        %v930 = vpop.f32.mrb[0].mxu0
        %v931 = vadd.f32 %v878, %v930
        %v932 = vpop.f32.mrb[0].mxu0
        %v933 = vpop.f32.mrb[0].mxu0
        %v934 = vpop.f32.mrb[0].mxu0
        %935 = vdwg.mxu0
        %v936 = vpack.c.bf16 %v931, %v931
        %v937 = vld [vmem:[%s790] sm:$0xf]
        %v938 = vld [vmem:[%s790 + $0x4] sm:$0xf]
        %v939 = vld [vmem:[%s790 + $0x8] sm:$0xf]
        %v940 = vld [vmem:[%s790 + $0xc] sm:$0xf]
        %942 = vrot.lane.b32.xlu0 %v936, 96
        %v943 = vpop.permute.xlu0 %942
        %vm944 = vcmask 64512
        %v946 = vsel %vm944, %v936, 0
        %v949 = vsel %vm944, %v943, 0
        %951 = vmatprep.subr.bf16.mxu0 0
        %952 = vmatpush1.bf16.xpose.msra.mxu0 %v949
        %953 = vmatprep.subr.bf16.mxu0 0
        %954 = vmatpush1.bf16.xpose.msra.mxu0 0
        %955 = vmatprep.subr.bf16.mxu0 0
        %956 = vmatpush1.bf16.xpose.msra.mxu0 0
        %957 = vmatprep.subr.bf16.mxu0 0
        %958 = vmatpush1.bf16.xpose.msra.mxu0 0
        %959 = vmatprep.subr.bf16.mxu0 0
        %960 = vmatpush1.bf16.xpose.msra.mxu0 0
        %961 = vmatprep.subr.bf16.mxu0 0
        %962 = vmatpush1.bf16.xpose.msra.mxu0 0
        %963 = vmatprep.subr.bf16.mxu0 0
        %964 = vmatpush1.bf16.xpose.msra.mxu0 0
        %965 = vmatprep.subr.bf16.mxu0 0
        %966 = vmatpush1.bf16.xpose.msra.mxu0 0
        %967 = vmatprep.subr.bf16.mxu0 0
        %968 = vmatpush1.bf16.xpose.msra.mxu0 0
        %969 = vmatprep.subr.bf16.mxu0 0
        %970 = vmatpush1.bf16.xpose.msra.mxu0 0
        %971 = vmatprep.subr.bf16.mxu0 0
        %972 = vmatpush1.bf16.xpose.msra.mxu0 0
        %973 = vmatprep.subr.bf16.mxu0 0
        %974 = vmatpush1.bf16.xpose.msra.mxu0 0
        %975 = vmatprep.subr.bf16.mxu0 0
        %976 = vmatpush1.bf16.xpose.msra.mxu0 0
        %977 = vmatprep.subr.bf16.mxu0 0
        %978 = vmatpush1.bf16.xpose.msra.mxu0 0
        %979 = vmatprep.subr.bf16.mxu0 0
        %980 = vmatpush1.bf16.xpose.msra.mxu0 0
        %981 = vmatprep.subr.bf16.mxu0 0
        %982 = vmatpush1.bf16.xpose.msra.mxu0 0
        %983 = vmatprep.mubr.bf16.mxu0 0
        %984 = vmatmul.mubr.bf16.gmra.mrb[0].mxu0 %v946
        %v985 = vpop.f32.mrb[0].mxu0
        %v986 = vadd.f32 0.0, %v985
        %v987 = vpop.f32.mrb[0].mxu0
        %v988 = vpop.f32.mrb[0].mxu0
        %v989 = vpop.f32.mrb[0].mxu0
        %990 = vdwg.mxu0
        %v991 = vmul.f32 %v986, 0.35355338
        %v992 = vadd.f32 %v991, %v867
        %v993 = vsel %vm944, %v992, -inf
        %994 = vmax.xlane.f32.xlu0 %v993
        %v995 = vpop.xlane.xlu0 %994
        %v996 = vsub.f32 %v992, %v995
        %v997 = vmul.f32 %v996, 1.442695
        %v998 = vpow.pop %v997
        %v999 = vsel %vm944, %v998, 0.0
        %1000 = vadd.xlane.f32.xlu0 %v999
        %v1001 = vpop.xlane.xlu0 %1000
        %v1002 = vrcp.pop %v1001
        %v1003 = vmul.f32 %v998, %v1002
        %v1004 = vpack.c.bf16 %v1003, %v1003
        %1005 = vrot.lane.b32.xlu0 %v936, 64
        %v1006 = vpop.permute.xlu0 %1005
        %v1008 = vsel %vm944, %v1004, 0
        %vm1010 = vcmask 1043456
        %v1012 = vsel %vm1010, %v1006, 0
        %1014 = vmatprep.subr.bf16.mxu0 0
        %1015 = vmatpush1.bf16.msra.mxu0 %v1012
        %1016 = vmatprep.subr.bf16.mxu0 0
        %1017 = vmatpush1.bf16.msra.mxu0 0
        %1018 = vmatprep.subr.bf16.mxu0 0
        %1019 = vmatpush1.bf16.msra.mxu0 0
        %1020 = vmatprep.subr.bf16.mxu0 0
        %1021 = vmatpush1.bf16.msra.mxu0 0
        %1022 = vmatprep.subr.bf16.mxu0 0
        %1023 = vmatpush1.bf16.msra.mxu0 0
        %1024 = vmatprep.subr.bf16.mxu0 0
        %1025 = vmatpush1.bf16.msra.mxu0 0
        %1026 = vmatprep.subr.bf16.mxu0 0
        %1027 = vmatpush1.bf16.msra.mxu0 0
        %1028 = vmatprep.subr.bf16.mxu0 0
        %1029 = vmatpush1.bf16.msra.mxu0 0
        %1030 = vmatprep.subr.bf16.mxu0 0
        %1031 = vmatpush1.bf16.msra.mxu0 0
        %1032 = vmatprep.subr.bf16.mxu0 0
        %1033 = vmatpush1.bf16.msra.mxu0 0
        %1034 = vmatprep.subr.bf16.mxu0 0
        %1035 = vmatpush1.bf16.msra.mxu0 0
        %1036 = vmatprep.subr.bf16.mxu0 0
        %1037 = vmatpush1.bf16.msra.mxu0 0
        %1038 = vmatprep.subr.bf16.mxu0 0
        %1039 = vmatpush1.bf16.msra.mxu0 0
        %1040 = vmatprep.subr.bf16.mxu0 0
        %1041 = vmatpush1.bf16.msra.mxu0 0
        %1042 = vmatprep.subr.bf16.mxu0 0
        %1043 = vmatpush1.bf16.msra.mxu0 0
        %1044 = vmatprep.subr.bf16.mxu0 0
        %1045 = vmatpush1.bf16.msra.mxu0 0
        %1046 = vmatprep.mubr.bf16.mxu0 0
        %1047 = vmatmul.mubr.bf16.gmra.mrb[0].mxu0 %v1008
        %v1048 = vpop.f32.mrb[0].mxu0
        %v1049 = vadd.f32 0.0, %v1048
        %v1050 = vpop.f32.mrb[0].mxu0
        %v1051 = vpop.f32.mrb[0].mxu0
        %v1052 = vpop.f32.mrb[0].mxu0
        %1053 = vdwg.mxu0
        %v1054 = vpack.c.bf16 %v1049, %v1049
        %1055 = vrot.lane.b32.xlu0 %v936, 120
        %v1056 = vpop.permute.xlu0 %1055
        %1057 = vrot.lane.b32.xlu0 %v936, 88
        %v1058 = vpop.permute.xlu0 %1057
        %v1060 = vsel %vm944, %v1056, 0
        %v1063 = vsel %vm944, %v1058, 0
        %1065 = vmatprep.subr.bf16.mxu0 0
        %1066 = vmatpush1.bf16.xpose.msra.mxu0 %v1063
        %1067 = vmatprep.subr.bf16.mxu0 0
        %1068 = vmatpush1.bf16.xpose.msra.mxu0 0
        %1069 = vmatprep.subr.bf16.mxu0 0
        %1070 = vmatpush1.bf16.xpose.msra.mxu0 0
        %1071 = vmatprep.subr.bf16.mxu0 0
        %1072 = vmatpush1.bf16.xpose.msra.mxu0 0
        %1073 = vmatprep.subr.bf16.mxu0 0
        %1074 = vmatpush1.bf16.xpose.msra.mxu0 0
        %1075 = vmatprep.subr.bf16.mxu0 0
        %1076 = vmatpush1.bf16.xpose.msra.mxu0 0
        %1077 = vmatprep.subr.bf16.mxu0 0
        %1078 = vmatpush1.bf16.xpose.msra.mxu0 0
        %1079 = vmatprep.subr.bf16.mxu0 0
        %1080 = vmatpush1.bf16.xpose.msra.mxu0 0
        %1081 = vmatprep.subr.bf16.mxu0 0
        %1082 = vmatpush1.bf16.xpose.msra.mxu0 0
        %1083 = vmatprep.subr.bf16.mxu0 0
        %1084 = vmatpush1.bf16.xpose.msra.mxu0 0
        %1085 = vmatprep.subr.bf16.mxu0 0
        %1086 = vmatpush1.bf16.xpose.msra.mxu0 0
        %1087 = vmatprep.subr.bf16.mxu0 0
        %1088 = vmatpush1.bf16.xpose.msra.mxu0 0
        %1089 = vmatprep.subr.bf16.mxu0 0
        %1090 = vmatpush1.bf16.xpose.msra.mxu0 0
        %1091 = vmatprep.subr.bf16.mxu0 0
        %1092 = vmatpush1.bf16.xpose.msra.mxu0 0
        %1093 = vmatprep.subr.bf16.mxu0 0
        %1094 = vmatpush1.bf16.xpose.msra.mxu0 0
        %1095 = vmatprep.subr.bf16.mxu0 0
        %1096 = vmatpush1.bf16.xpose.msra.mxu0 0
        %1097 = vmatprep.mubr.bf16.mxu0 0
        %1098 = vmatmul.mubr.bf16.gmra.mrb[0].mxu0 %v1060
        %v1099 = vpop.f32.mrb[0].mxu0
        %v1100 = vadd.f32 0.0, %v1099
        %v1101 = vpop.f32.mrb[0].mxu0
        %v1102 = vpop.f32.mrb[0].mxu0
        %v1103 = vpop.f32.mrb[0].mxu0
        %1104 = vdwg.mxu0
        %v1105 = vmul.f32 %v1100, 0.35355338
        %v1106 = vadd.f32 %v1105, %v867
        %v1107 = vsel %vm944, %v1106, -inf
        %1108 = vmax.xlane.f32.xlu0 %v1107
        %v1109 = vpop.xlane.xlu0 %1108
        %v1110 = vsub.f32 %v1106, %v1109
        %v1111 = vmul.f32 %v1110, 1.442695
        %v1112 = vpow.pop %v1111
        %v1113 = vsel %vm944, %v1112, 0.0
        %1114 = vadd.xlane.f32.xlu0 %v1113
        %v1115 = vpop.xlane.xlu0 %1114
        %v1116 = vrcp.pop %v1115
        %v1117 = vmul.f32 %v1112, %v1116
        %v1118 = vpack.c.bf16 %v1117, %v1117
        %1119 = vrot.lane.b32.xlu0 %v936, 56
        %v1120 = vpop.permute.xlu0 %1119
        %v1122 = vsel %vm944, %v1118, 0
        %v1125 = vsel %vm1010, %v1120, 0
        %1127 = vmatprep.subr.bf16.mxu0 0
        %1128 = vmatpush1.bf16.msra.mxu0 %v1125
        %1129 = vmatprep.subr.bf16.mxu0 0
        %1130 = vmatpush1.bf16.msra.mxu0 0
        %1131 = vmatprep.subr.bf16.mxu0 0
        %1132 = vmatpush1.bf16.msra.mxu0 0
        %1133 = vmatprep.subr.bf16.mxu0 0
        %1134 = vmatpush1.bf16.msra.mxu0 0
        %1135 = vmatprep.subr.bf16.mxu0 0
        %1136 = vmatpush1.bf16.msra.mxu0 0
        %1137 = vmatprep.subr.bf16.mxu0 0
        %1138 = vmatpush1.bf16.msra.mxu0 0
        %1139 = vmatprep.subr.bf16.mxu0 0
        %1140 = vmatpush1.bf16.msra.mxu0 0
        %1141 = vmatprep.subr.bf16.mxu0 0
        %1142 = vmatpush1.bf16.msra.mxu0 0
        %1143 = vmatprep.subr.bf16.mxu0 0
        %1144 = vmatpush1.bf16.msra.mxu0 0
        %1145 = vmatprep.subr.bf16.mxu0 0
        %1146 = vmatpush1.bf16.msra.mxu0 0
        %1147 = vmatprep.subr.bf16.mxu0 0
        %1148 = vmatpush1.bf16.msra.mxu0 0
        %1149 = vmatprep.subr.bf16.mxu0 0
        %1150 = vmatpush1.bf16.msra.mxu0 0
        %1151 = vmatprep.subr.bf16.mxu0 0
        %1152 = vmatpush1.bf16.msra.mxu0 0
        %1153 = vmatprep.subr.bf16.mxu0 0
        %1154 = vmatpush1.bf16.msra.mxu0 0
        %1155 = vmatprep.subr.bf16.mxu0 0
        %1156 = vmatpush1.bf16.msra.mxu0 0
        %1157 = vmatprep.subr.bf16.mxu0 0
        %1158 = vmatpush1.bf16.msra.mxu0 0
        %1159 = vmatprep.mubr.bf16.mxu0 0
        %1160 = vmatmul.mubr.bf16.gmra.mrb[0].mxu0 %v1122
        %v1161 = vpop.f32.mrb[0].mxu0
        %v1162 = vadd.f32 0.0, %v1161
        %v1163 = vpop.f32.mrb[0].mxu0
        %v1164 = vpop.f32.mrb[0].mxu0
        %v1165 = vpop.f32.mrb[0].mxu0
        %1166 = vdwg.mxu0
        %v1167 = vpack.c.bf16 %v1162, %v1162
        %v1169 = vsel %vm944, %v1167, 0
        %v1172 = vsel %vm1010, %v938, 0
        %1174 = vmatprep.subr.bf16.mxu0 0
        %1175 = vmatpush1.bf16.msra.mxu0 %v1172
        %1176 = vmatprep.subr.bf16.mxu0 0
        %1177 = vmatpush1.bf16.msra.mxu0 0
        %1178 = vmatprep.subr.bf16.mxu0 0
        %1179 = vmatpush1.bf16.msra.mxu0 0
        %1180 = vmatprep.subr.bf16.mxu0 0
        %1181 = vmatpush1.bf16.msra.mxu0 0
        %1182 = vmatprep.subr.bf16.mxu0 0
        %1183 = vmatpush1.bf16.msra.mxu0 0
        %1184 = vmatprep.subr.bf16.mxu0 0
        %1185 = vmatpush1.bf16.msra.mxu0 0
        %1186 = vmatprep.subr.bf16.mxu0 0
        %1187 = vmatpush1.bf16.msra.mxu0 0
        %1188 = vmatprep.subr.bf16.mxu0 0
        %1189 = vmatpush1.bf16.msra.mxu0 0
        %1190 = vmatprep.subr.bf16.mxu0 0
        %1191 = vmatpush1.bf16.msra.mxu0 0
        %1192 = vmatprep.subr.bf16.mxu0 0
        %1193 = vmatpush1.bf16.msra.mxu0 0
        %1194 = vmatprep.subr.bf16.mxu0 0
        %1195 = vmatpush1.bf16.msra.mxu0 0
        %1196 = vmatprep.subr.bf16.mxu0 0
        %1197 = vmatpush1.bf16.msra.mxu0 0
        %1198 = vmatprep.subr.bf16.mxu0 0
        %1199 = vmatpush1.bf16.msra.mxu0 0
        %1200 = vmatprep.subr.bf16.mxu0 0
        %1201 = vmatpush1.bf16.msra.mxu0 0
        %1202 = vmatprep.subr.bf16.mxu0 0
        %1203 = vmatpush1.bf16.msra.mxu0 0
        %1204 = vmatprep.subr.bf16.mxu0 0
        %1205 = vmatpush1.bf16.msra.mxu0 0
        %1206 = vmatprep.mubr.bf16.mxu0 0
        %1207 = vmatmul.mubr.bf16.gmra.mrb[0].mxu0 %v1169
        %v1208 = vpop.f32.mrb[0].mxu0
        %v1209 = vadd.f32 0.0, %v1208
        %v1210 = vpop.f32.mrb[0].mxu0
        %v1211 = vpop.f32.mrb[0].mxu0
        %v1212 = vpop.f32.mrb[0].mxu0
        %1213 = vdwg.mxu0
        %v1215 = vsel %vm944, %v1054, 0
        %v1218 = vsel %vm1010, %v937, 0
        %1220 = vmatprep.subr.bf16.mxu0 0
        %1221 = vmatpush1.bf16.msra.mxu0 %v1218
        %1222 = vmatprep.subr.bf16.mxu0 0
        %1223 = vmatpush1.bf16.msra.mxu0 0
        %1224 = vmatprep.subr.bf16.mxu0 0
        %1225 = vmatpush1.bf16.msra.mxu0 0
        %1226 = vmatprep.subr.bf16.mxu0 0
        %1227 = vmatpush1.bf16.msra.mxu0 0
        %1228 = vmatprep.subr.bf16.mxu0 0
        %1229 = vmatpush1.bf16.msra.mxu0 0
        %1230 = vmatprep.subr.bf16.mxu0 0
        %1231 = vmatpush1.bf16.msra.mxu0 0
        %1232 = vmatprep.subr.bf16.mxu0 0
        %1233 = vmatpush1.bf16.msra.mxu0 0
        %1234 = vmatprep.subr.bf16.mxu0 0
        %1235 = vmatpush1.bf16.msra.mxu0 0
        %1236 = vmatprep.subr.bf16.mxu0 0
        %1237 = vmatpush1.bf16.msra.mxu0 0
        %1238 = vmatprep.subr.bf16.mxu0 0
        %1239 = vmatpush1.bf16.msra.mxu0 0
        %1240 = vmatprep.subr.bf16.mxu0 0
        %1241 = vmatpush1.bf16.msra.mxu0 0
        %1242 = vmatprep.subr.bf16.mxu0 0
        %1243 = vmatpush1.bf16.msra.mxu0 0
        %1244 = vmatprep.subr.bf16.mxu0 0
        %1245 = vmatpush1.bf16.msra.mxu0 0
        %1246 = vmatprep.subr.bf16.mxu0 0
        %1247 = vmatpush1.bf16.msra.mxu0 0
        %1248 = vmatprep.subr.bf16.mxu0 0
        %1249 = vmatpush1.bf16.msra.mxu0 0
        %1250 = vmatprep.subr.bf16.mxu0 0
        %1251 = vmatpush1.bf16.msra.mxu0 0
        %1252 = vmatprep.mubr.bf16.mxu0 0
        %1253 = vmatmul.mubr.bf16.gmra.mrb[0].mxu0 %v1215
        %v1254 = vpop.f32.mrb[0].mxu0
        %v1255 = vadd.f32 %v1209, %v1254
        %v1256 = vpop.f32.mrb[0].mxu0
        %v1257 = vpop.f32.mrb[0].mxu0
        %v1258 = vpop.f32.mrb[0].mxu0
        %1259 = vdwg.mxu0
        %1260 = vrot.lane.b32.xlu0 %v936, 112
        %v1261 = vpop.permute.xlu0 %1260
        %1262 = vrot.lane.b32.xlu0 %v936, 80
        %v1263 = vpop.permute.xlu0 %1262
        %v1265 = vsel %vm944, %v1261, 0
        %v1268 = vsel %vm944, %v1263, 0
        %1270 = vmatprep.subr.bf16.mxu0 0
        %1271 = vmatpush1.bf16.xpose.msra.mxu0 %v1268
        %1272 = vmatprep.subr.bf16.mxu0 0
        %1273 = vmatpush1.bf16.xpose.msra.mxu0 0
        %1274 = vmatprep.subr.bf16.mxu0 0
        %1275 = vmatpush1.bf16.xpose.msra.mxu0 0
        %1276 = vmatprep.subr.bf16.mxu0 0
        %1277 = vmatpush1.bf16.xpose.msra.mxu0 0
        %1278 = vmatprep.subr.bf16.mxu0 0
        %1279 = vmatpush1.bf16.xpose.msra.mxu0 0
        %1280 = vmatprep.subr.bf16.mxu0 0
        %1281 = vmatpush1.bf16.xpose.msra.mxu0 0
        %1282 = vmatprep.subr.bf16.mxu0 0
        %1283 = vmatpush1.bf16.xpose.msra.mxu0 0
        %1284 = vmatprep.subr.bf16.mxu0 0
        %1285 = vmatpush1.bf16.xpose.msra.mxu0 0
        %1286 = vmatprep.subr.bf16.mxu0 0
        %1287 = vmatpush1.bf16.xpose.msra.mxu0 0
        %1288 = vmatprep.subr.bf16.mxu0 0
        %1289 = vmatpush1.bf16.xpose.msra.mxu0 0
        %1290 = vmatprep.subr.bf16.mxu0 0
        %1291 = vmatpush1.bf16.xpose.msra.mxu0 0
        %1292 = vmatprep.subr.bf16.mxu0 0
        %1293 = vmatpush1.bf16.xpose.msra.mxu0 0
        %1294 = vmatprep.subr.bf16.mxu0 0
        %1295 = vmatpush1.bf16.xpose.msra.mxu0 0
        %1296 = vmatprep.subr.bf16.mxu0 0
        %1297 = vmatpush1.bf16.xpose.msra.mxu0 0
        %1298 = vmatprep.subr.bf16.mxu0 0
        %1299 = vmatpush1.bf16.xpose.msra.mxu0 0
        %1300 = vmatprep.subr.bf16.mxu0 0
        %1301 = vmatpush1.bf16.xpose.msra.mxu0 0
        %1302 = vmatprep.mubr.bf16.mxu0 0
        %1303 = vmatmul.mubr.bf16.gmra.mrb[0].mxu0 %v1265
        %v1304 = vpop.f32.mrb[0].mxu0
        %v1305 = vadd.f32 0.0, %v1304
        %v1306 = vpop.f32.mrb[0].mxu0
        %v1307 = vpop.f32.mrb[0].mxu0
        %v1308 = vpop.f32.mrb[0].mxu0
        %1309 = vdwg.mxu0
        %v1310 = vmul.f32 %v1305, 0.35355338
        %v1311 = vadd.f32 %v1310, %v867
        %v1312 = vsel %vm944, %v1311, -inf
        %1313 = vmax.xlane.f32.xlu0 %v1312
        %v1314 = vpop.xlane.xlu0 %1313
        %v1315 = vsub.f32 %v1311, %v1314
        %v1316 = vmul.f32 %v1315, 1.442695
        %v1317 = vpow.pop %v1316
        %v1318 = vsel %vm944, %v1317, 0.0
        %1319 = vadd.xlane.f32.xlu0 %v1318
        %v1320 = vpop.xlane.xlu0 %1319
        %v1321 = vrcp.pop %v1320
        %v1322 = vmul.f32 %v1317, %v1321
        %v1323 = vpack.c.bf16 %v1322, %v1322
        %1324 = vrot.lane.b32.xlu0 %v936, 48
        %v1325 = vpop.permute.xlu0 %1324
        %v1327 = vsel %vm944, %v1323, 0
        %v1330 = vsel %vm1010, %v1325, 0
        %1332 = vmatprep.subr.bf16.mxu0 0
        %1333 = vmatpush1.bf16.msra.mxu0 %v1330
        %1334 = vmatprep.subr.bf16.mxu0 0
        %1335 = vmatpush1.bf16.msra.mxu0 0
        %1336 = vmatprep.subr.bf16.mxu0 0
        %1337 = vmatpush1.bf16.msra.mxu0 0
        %1338 = vmatprep.subr.bf16.mxu0 0
        %1339 = vmatpush1.bf16.msra.mxu0 0
        %1340 = vmatprep.subr.bf16.mxu0 0
        %1341 = vmatpush1.bf16.msra.mxu0 0
        %1342 = vmatprep.subr.bf16.mxu0 0
        %1343 = vmatpush1.bf16.msra.mxu0 0
        %1344 = vmatprep.subr.bf16.mxu0 0
        %1345 = vmatpush1.bf16.msra.mxu0 0
        %1346 = vmatprep.subr.bf16.mxu0 0
        %1347 = vmatpush1.bf16.msra.mxu0 0
        %1348 = vmatprep.subr.bf16.mxu0 0
        %1349 = vmatpush1.bf16.msra.mxu0 0
        %1350 = vmatprep.subr.bf16.mxu0 0
        %1351 = vmatpush1.bf16.msra.mxu0 0
        %1352 = vmatprep.subr.bf16.mxu0 0
        %1353 = vmatpush1.bf16.msra.mxu0 0
        %1354 = vmatprep.subr.bf16.mxu0 0
        %1355 = vmatpush1.bf16.msra.mxu0 0
        %1356 = vmatprep.subr.bf16.mxu0 0
        %1357 = vmatpush1.bf16.msra.mxu0 0
        %1358 = vmatprep.subr.bf16.mxu0 0
        %1359 = vmatpush1.bf16.msra.mxu0 0
        %1360 = vmatprep.subr.bf16.mxu0 0
        %1361 = vmatpush1.bf16.msra.mxu0 0
        %1362 = vmatprep.subr.bf16.mxu0 0
        %1363 = vmatpush1.bf16.msra.mxu0 0
        %1364 = vmatprep.mubr.bf16.mxu0 0
        %1365 = vmatmul.mubr.bf16.gmra.mrb[0].mxu0 %v1327
        %v1366 = vpop.f32.mrb[0].mxu0
        %v1367 = vadd.f32 0.0, %v1366
        %v1368 = vpop.f32.mrb[0].mxu0
        %v1369 = vpop.f32.mrb[0].mxu0
        %v1370 = vpop.f32.mrb[0].mxu0
        %1371 = vdwg.mxu0
        %v1372 = vpack.c.bf16 %v1367, %v1367
        %v1374 = vsel %vm944, %v1372, 0
        %v1377 = vsel %vm1010, %v939, 0
        %1379 = vmatprep.subr.bf16.mxu0 0
        %1380 = vmatpush1.bf16.msra.mxu0 %v1377
        %1381 = vmatprep.subr.bf16.mxu0 0
        %1382 = vmatpush1.bf16.msra.mxu0 0
        %1383 = vmatprep.subr.bf16.mxu0 0
        %1384 = vmatpush1.bf16.msra.mxu0 0
        %1385 = vmatprep.subr.bf16.mxu0 0
        %1386 = vmatpush1.bf16.msra.mxu0 0
        %1387 = vmatprep.subr.bf16.mxu0 0
        %1388 = vmatpush1.bf16.msra.mxu0 0
        %1389 = vmatprep.subr.bf16.mxu0 0
        %1390 = vmatpush1.bf16.msra.mxu0 0
        %1391 = vmatprep.subr.bf16.mxu0 0
        %1392 = vmatpush1.bf16.msra.mxu0 0
        %1393 = vmatprep.subr.bf16.mxu0 0
        %1394 = vmatpush1.bf16.msra.mxu0 0
        %1395 = vmatprep.subr.bf16.mxu0 0
        %1396 = vmatpush1.bf16.msra.mxu0 0
        %1397 = vmatprep.subr.bf16.mxu0 0
        %1398 = vmatpush1.bf16.msra.mxu0 0
        %1399 = vmatprep.subr.bf16.mxu0 0
        %1400 = vmatpush1.bf16.msra.mxu0 0
        %1401 = vmatprep.subr.bf16.mxu0 0
        %1402 = vmatpush1.bf16.msra.mxu0 0
        %1403 = vmatprep.subr.bf16.mxu0 0
        %1404 = vmatpush1.bf16.msra.mxu0 0
        %1405 = vmatprep.subr.bf16.mxu0 0
        %1406 = vmatpush1.bf16.msra.mxu0 0
        %1407 = vmatprep.subr.bf16.mxu0 0
        %1408 = vmatpush1.bf16.msra.mxu0 0
        %1409 = vmatprep.subr.bf16.mxu0 0
        %1410 = vmatpush1.bf16.msra.mxu0 0
        %1411 = vmatprep.mubr.bf16.mxu0 0
        %1412 = vmatmul.mubr.bf16.gmra.mrb[0].mxu0 %v1374
        %v1413 = vpop.f32.mrb[0].mxu0
        %v1414 = vadd.f32 0.0, %v1413
        %v1415 = vpop.f32.mrb[0].mxu0
        %v1416 = vpop.f32.mrb[0].mxu0
        %v1417 = vpop.f32.mrb[0].mxu0
        %1418 = vdwg.mxu0
        %v1419 = vadd.f32 %v1255, %v1414
        %1420 = vrot.lane.b32.xlu0 %v936, 104
        %v1421 = vpop.permute.xlu0 %1420
        %1422 = vrot.lane.b32.xlu0 %v936, 72
        %v1423 = vpop.permute.xlu0 %1422
        %v1425 = vsel %vm944, %v1421, 0
        %v1428 = vsel %vm944, %v1423, 0
        %1430 = vmatprep.subr.bf16.mxu0 0
        %1431 = vmatpush1.bf16.xpose.msra.mxu0 %v1428
        %1432 = vmatprep.subr.bf16.mxu0 0
        %1433 = vmatpush1.bf16.xpose.msra.mxu0 0
        %1434 = vmatprep.subr.bf16.mxu0 0
        %1435 = vmatpush1.bf16.xpose.msra.mxu0 0
        %1436 = vmatprep.subr.bf16.mxu0 0
        %1437 = vmatpush1.bf16.xpose.msra.mxu0 0
        %1438 = vmatprep.subr.bf16.mxu0 0
        %1439 = vmatpush1.bf16.xpose.msra.mxu0 0
        %1440 = vmatprep.subr.bf16.mxu0 0
        %1441 = vmatpush1.bf16.xpose.msra.mxu0 0
        %1442 = vmatprep.subr.bf16.mxu0 0
        %1443 = vmatpush1.bf16.xpose.msra.mxu0 0
        %1444 = vmatprep.subr.bf16.mxu0 0
        %1445 = vmatpush1.bf16.xpose.msra.mxu0 0
        %1446 = vmatprep.subr.bf16.mxu0 0
        %1447 = vmatpush1.bf16.xpose.msra.mxu0 0
        %1448 = vmatprep.subr.bf16.mxu0 0
        %1449 = vmatpush1.bf16.xpose.msra.mxu0 0
        %1450 = vmatprep.subr.bf16.mxu0 0
        %1451 = vmatpush1.bf16.xpose.msra.mxu0 0
        %1452 = vmatprep.subr.bf16.mxu0 0
        %1453 = vmatpush1.bf16.xpose.msra.mxu0 0
        %1454 = vmatprep.subr.bf16.mxu0 0
        %1455 = vmatpush1.bf16.xpose.msra.mxu0 0
        %1456 = vmatprep.subr.bf16.mxu0 0
        %1457 = vmatpush1.bf16.xpose.msra.mxu0 0
        %1458 = vmatprep.subr.bf16.mxu0 0
        %1459 = vmatpush1.bf16.xpose.msra.mxu0 0
        %1460 = vmatprep.subr.bf16.mxu0 0
        %1461 = vmatpush1.bf16.xpose.msra.mxu0 0
        %1462 = vmatprep.mubr.bf16.mxu0 0
        %1463 = vmatmul.mubr.bf16.gmra.mrb[0].mxu0 %v1425
        %v1464 = vpop.f32.mrb[0].mxu0
        %v1465 = vadd.f32 0.0, %v1464
        %v1466 = vpop.f32.mrb[0].mxu0
        %v1467 = vpop.f32.mrb[0].mxu0
        %v1468 = vpop.f32.mrb[0].mxu0
        %1469 = vdwg.mxu0
        %v1470 = vmul.f32 %v1465, 0.35355338
        %v1471 = vadd.f32 %v1470, %v867
        %v1472 = vsel %vm944, %v1471, -inf
        %1473 = vmax.xlane.f32.xlu0 %v1472
        %v1474 = vpop.xlane.xlu0 %1473
        %v1475 = vsub.f32 %v1471, %v1474
        %v1476 = vmul.f32 %v1475, 1.442695
        %v1477 = vpow.pop %v1476
        %v1478 = vsel %vm944, %v1477, 0.0
        %1479 = vadd.xlane.f32.xlu0 %v1478
        %v1480 = vpop.xlane.xlu0 %1479
        %v1481 = vrcp.pop %v1480
        %v1482 = vmul.f32 %v1477, %v1481
        %v1483 = vpack.c.bf16 %v1482, %v1482
        %1484 = vrot.lane.b32.xlu0 %v936, 40
        %v1485 = vpop.permute.xlu0 %1484
        %v1487 = vsel %vm944, %v1483, 0
        %v1490 = vsel %vm1010, %v1485, 0
        %1492 = vmatprep.subr.bf16.mxu0 0
        %1493 = vmatpush1.bf16.msra.mxu0 %v1490
        %1494 = vmatprep.subr.bf16.mxu0 0
        %1495 = vmatpush1.bf16.msra.mxu0 0
        %1496 = vmatprep.subr.bf16.mxu0 0
        %1497 = vmatpush1.bf16.msra.mxu0 0
        %1498 = vmatprep.subr.bf16.mxu0 0
        %1499 = vmatpush1.bf16.msra.mxu0 0
        %1500 = vmatprep.subr.bf16.mxu0 0
        %1501 = vmatpush1.bf16.msra.mxu0 0
        %1502 = vmatprep.subr.bf16.mxu0 0
        %1503 = vmatpush1.bf16.msra.mxu0 0
        %1504 = vmatprep.subr.bf16.mxu0 0
        %1505 = vmatpush1.bf16.msra.mxu0 0
        %1506 = vmatprep.subr.bf16.mxu0 0
        %1507 = vmatpush1.bf16.msra.mxu0 0
        %1508 = vmatprep.subr.bf16.mxu0 0
        %1509 = vmatpush1.bf16.msra.mxu0 0
        %1510 = vmatprep.subr.bf16.mxu0 0
        %1511 = vmatpush1.bf16.msra.mxu0 0
        %1512 = vmatprep.subr.bf16.mxu0 0
        %1513 = vmatpush1.bf16.msra.mxu0 0
        %1514 = vmatprep.subr.bf16.mxu0 0
        %1515 = vmatpush1.bf16.msra.mxu0 0
        %1516 = vmatprep.subr.bf16.mxu0 0
        %1517 = vmatpush1.bf16.msra.mxu0 0
        %1518 = vmatprep.subr.bf16.mxu0 0
        %1519 = vmatpush1.bf16.msra.mxu0 0
        %1520 = vmatprep.subr.bf16.mxu0 0
        %1521 = vmatpush1.bf16.msra.mxu0 0
        %1522 = vmatprep.subr.bf16.mxu0 0
        %1523 = vmatpush1.bf16.msra.mxu0 0
        %1524 = vmatprep.mubr.bf16.mxu0 0
        %1525 = vmatmul.mubr.bf16.gmra.mrb[0].mxu0 %v1487
        %v1526 = vpop.f32.mrb[0].mxu0
        %v1527 = vadd.f32 0.0, %v1526
        %v1528 = vpop.f32.mrb[0].mxu0
        %v1529 = vpop.f32.mrb[0].mxu0
        %v1530 = vpop.f32.mrb[0].mxu0
        %1531 = vdwg.mxu0
        %v1532 = vpack.c.bf16 %v1527, %v1527
        %v1534 = vsel %vm944, %v1532, 0
        %v1537 = vsel %vm1010, %v940, 0
        %1539 = vmatprep.subr.bf16.mxu0 0
        %1540 = vmatpush1.bf16.msra.mxu0 %v1537
        %1541 = vmatprep.subr.bf16.mxu0 0
        %1542 = vmatpush1.bf16.msra.mxu0 0
        %1543 = vmatprep.subr.bf16.mxu0 0
        %1544 = vmatpush1.bf16.msra.mxu0 0
        %1545 = vmatprep.subr.bf16.mxu0 0
        %1546 = vmatpush1.bf16.msra.mxu0 0
        %1547 = vmatprep.subr.bf16.mxu0 0
        %1548 = vmatpush1.bf16.msra.mxu0 0
        %1549 = vmatprep.subr.bf16.mxu0 0
        %1550 = vmatpush1.bf16.msra.mxu0 0
        %1551 = vmatprep.subr.bf16.mxu0 0
        %1552 = vmatpush1.bf16.msra.mxu0 0
        %1553 = vmatprep.subr.bf16.mxu0 0
        %1554 = vmatpush1.bf16.msra.mxu0 0
        %1555 = vmatprep.subr.bf16.mxu0 0
        %1556 = vmatpush1.bf16.msra.mxu0 0
        %1557 = vmatprep.subr.bf16.mxu0 0
        %1558 = vmatpush1.bf16.msra.mxu0 0
        %1559 = vmatprep.subr.bf16.mxu0 0
        %1560 = vmatpush1.bf16.msra.mxu0 0
        %1561 = vmatprep.subr.bf16.mxu0 0
        %1562 = vmatpush1.bf16.msra.mxu0 0
        %1563 = vmatprep.subr.bf16.mxu0 0
        %1564 = vmatpush1.bf16.msra.mxu0 0
        %1565 = vmatprep.subr.bf16.mxu0 0
        %1566 = vmatpush1.bf16.msra.mxu0 0
        %1567 = vmatprep.subr.bf16.mxu0 0
        %1568 = vmatpush1.bf16.msra.mxu0 0
        %1569 = vmatprep.subr.bf16.mxu0 0
        %1570 = vmatpush1.bf16.msra.mxu0 0
        %1571 = vmatprep.mubr.bf16.mxu0 0
        %1572 = vmatmul.mubr.bf16.gmra.mrb[0].mxu0 %v1534
        %v1573 = vpop.f32.mrb[0].mxu0
        %v1574 = vadd.f32 0.0, %v1573
        %v1575 = vpop.f32.mrb[0].mxu0
        %v1576 = vpop.f32.mrb[0].mxu0
        %v1577 = vpop.f32.mrb[0].mxu0
        %1578 = vdwg.mxu0
        %v1579 = vadd.f32 %v1419, %v1574
        %v1580 = vld [vmem:[%s793] sm:$0x1]
        %v1582 = vlaneseq
        %v1583 = vshrl.u32 %v1582, 7
        %v1584 = vsub.s32 0, %v1583
        %v1585 = vrot.slane %v1580, %v1584
        %v1587 = vadd.f32 %v1579, %v1585
        %v1588 = vadd.f32 %v860, %v1587
        %v1589 = vld [vmem:[%s796] sm:$0x1]
        %v1590 = vld [vmem:[%s799] sm:$0x1]
        %v1591 = vsel %vm892, %v1588, 0.0
        %1592 = vadd.xlane.f32.xlu0 %v1591
        %v1593 = vpop.xlane.xlu0 %1592
        %v1594 = vrcp.pop 32.0
        %v1595 = vmul.f32 %v1593, %v1594
        %v1596 = vsub.f32 %v1588, %v1595
        %v1597 = vmul.f32 %v1596, %v1596
        %v1598 = vsel %vm892, %v1597, 0.0
        %1599 = vadd.xlane.f32.xlu0 %v1598
        %v1600 = vpop.xlane.xlu0 %1599
        %v1601 = vmul.f32 %v1600, %v1594
        %v1602 = vadd.f32 %v1601, 1e-12
        %v1603 = vrsqrt.pop %v1602
        %v1604 = vmul.f32 %v1596, %v1603
        %v1606 = vlaneseq
        %v1607 = vshrl.u32 %v1606, 7
        %v1608 = vsub.s32 0, %v1607
        %v1609 = vrot.slane %v1589, %v1608
        %v1611 = vmul.f32 %v1604, %v1609
        %v1613 = vlaneseq
        %v1614 = vshrl.u32 %v1613, 7
        %v1615 = vsub.s32 0, %v1614
        %v1616 = vrot.slane %v1590, %v1615
        %v1618 = vadd.f32 %v1611, %v1616
        %v1619 = vpack.c.bf16 %v1618, %v1618
        %v1620 = vld [vmem:[%s804] sm:$0xf]
        %v1621 = vld [vmem:[%s804 + $0x4] sm:$0xf]
        %v1622 = vld [vmem:[%s804 + $0x8] sm:$0xf]
        %v1623 = vld [vmem:[%s804 + $0xc] sm:$0xf]
        %v1624 = vld [vmem:[%s807] sm:$0x1]
        %v1626 = vlaneseq
        %v1627 = vshrl.u32 %v1626, 7
        %v1628 = vsub.s32 0, %v1627
        %v1629 = vrot.slane %v1624, %v1628
        %v1635 = vunpack.c.l.b16 %v1620
        %v1636 = vunpack.c.l.b16 %v1621
        %v1637 = vunpack.c.l.b16 %v1622
        %v1638 = vunpack.c.l.b16 %v1623
        %v1639 = vpack.c.b16 %v1636, %v1635
        %v1640 = vpack.c.b16 %v1638, %v1637
        %v1644 = vsel %vm892, %v1619, 0
        %1646 = vmatprep.subr.bf16.mxu0 0
        %1647 = vmatpush1.bf16.msra.mxu0 %v1639
        %1648 = vmatprep.subr.bf16.mxu0 0
        %1649 = vmatpush1.bf16.msra.mxu0 %v1640
        %1650 = vmatprep.subr.bf16.mxu0 0
        %1651 = vmatpush1.bf16.msra.mxu0 0
        %1652 = vmatprep.subr.bf16.mxu0 0
        %1653 = vmatpush1.bf16.msra.mxu0 0
        %1654 = vmatprep.subr.bf16.mxu0 0
        %1655 = vmatpush1.bf16.msra.mxu0 0
        %1656 = vmatprep.subr.bf16.mxu0 0
        %1657 = vmatpush1.bf16.msra.mxu0 0
        %1658 = vmatprep.subr.bf16.mxu0 0
        %1659 = vmatpush1.bf16.msra.mxu0 0
        %1660 = vmatprep.subr.bf16.mxu0 0
        %1661 = vmatpush1.bf16.msra.mxu0 0
        %1662 = vmatprep.subr.bf16.mxu0 0
        %1663 = vmatpush1.bf16.msra.mxu0 0
        %1664 = vmatprep.subr.bf16.mxu0 0
        %1665 = vmatpush1.bf16.msra.mxu0 0
        %1666 = vmatprep.subr.bf16.mxu0 0
        %1667 = vmatpush1.bf16.msra.mxu0 0
        %1668 = vmatprep.subr.bf16.mxu0 0
        %1669 = vmatpush1.bf16.msra.mxu0 0
        %1670 = vmatprep.subr.bf16.mxu0 0
        %1671 = vmatpush1.bf16.msra.mxu0 0
        %1672 = vmatprep.subr.bf16.mxu0 0
        %1673 = vmatpush1.bf16.msra.mxu0 0
        %1674 = vmatprep.subr.bf16.mxu0 0
        %1675 = vmatpush1.bf16.msra.mxu0 0
        %1676 = vmatprep.subr.bf16.mxu0 0
        %1677 = vmatpush1.bf16.msra.mxu0 0
        %1678 = vmatprep.mubr.bf16.mxu0 0
        %1679 = vmatmul.mubr.bf16.gmra.mrb[0].mxu0 %v1644
        %v1680 = vpop.f32.mrb[0].mxu0
        %v1681 = vadd.f32 %v1629, %v1680
        %v1682 = vpop.f32.mrb[0].mxu0
        %v1683 = vpop.f32.mrb[0].mxu0
        %v1684 = vpop.f32.mrb[0].mxu0
        %1685 = vdwg.mxu0
        %v1686 = vmul.f32 %v1681, 0.5
        %v1687 = vmul.f32 %v1681, 0.044715
        %v1688 = vmul.f32 %v1687, %v1681
        %v1689 = vmul.f32 %v1688, %v1681
        %v1690 = vadd.f32 %v1681, %v1689
        %v1691 = vmul.f32 %v1690, 0.7978846
        %v1692 = vtanh.pop %v1691
        %v1693 = vadd.f32 %v1692, 1.0
        %v1694 = vmul.f32 %v1686, %v1693
        %v1695 = vpack.c.bf16 %v1694, %v1694
        %v1696 = vld [vmem:[%s812] sm:$0xf]
        %v1697 = vld [vmem:[%s812 + $0x4] sm:$0xf]
        %v1698 = vld [vmem:[%s812 + $0x8] sm:$0xf]
        %v1699 = vld [vmem:[%s812 + $0xc] sm:$0xf]
        %v1700 = vld [vmem:[%s812 + $0x10] sm:$0xf]
        %v1701 = vld [vmem:[%s812 + $0x14] sm:$0xf]
        %v1702 = vld [vmem:[%s812 + $0x18] sm:$0xf]
        %v1703 = vld [vmem:[%s812 + $0x1c] sm:$0xf]
        %v1704 = vld [vmem:[%s815] sm:$0x1]
        %v1706 = vlaneseq
        %v1707 = vshrl.u32 %v1706, 7
        %v1708 = vsub.s32 0, %v1707
        %v1709 = vrot.slane %v1704, %v1708
        %v1719 = vunpack.c.l.b16 %v1696
        %v1720 = vunpack.c.l.b16 %v1697
        %v1721 = vunpack.c.l.b16 %v1698
        %v1722 = vunpack.c.l.b16 %v1699
        %v1723 = vunpack.c.l.b16 %v1700
        %v1724 = vunpack.c.l.b16 %v1701
        %v1725 = vunpack.c.l.b16 %v1702
        %v1726 = vunpack.c.l.b16 %v1703
        %v1727 = vpack.c.b16 %v1720, %v1719
        %v1728 = vpack.c.b16 %v1722, %v1721
        %v1729 = vpack.c.b16 %v1724, %v1723
        %v1730 = vpack.c.b16 %v1726, %v1725
        %vm1735 = vcmask 523264
        %v1737 = vsel %vm1735, %v1695, 0
        %1739 = vmatprep.subr.bf16.mxu0 0
        %1740 = vmatpush1.bf16.msra.mxu0 %v1727
        %1741 = vmatprep.subr.bf16.mxu0 0
        %1742 = vmatpush1.bf16.msra.mxu0 %v1728
        %1743 = vmatprep.subr.bf16.mxu0 0
        %1744 = vmatpush1.bf16.msra.mxu0 %v1729
        %1745 = vmatprep.subr.bf16.mxu0 0
        %1746 = vmatpush1.bf16.msra.mxu0 %v1730
        %1747 = vmatprep.subr.bf16.mxu0 0
        %1748 = vmatpush1.bf16.msra.mxu0 0
        %1749 = vmatprep.subr.bf16.mxu0 0
        %1750 = vmatpush1.bf16.msra.mxu0 0
        %1751 = vmatprep.subr.bf16.mxu0 0
        %1752 = vmatpush1.bf16.msra.mxu0 0
        %1753 = vmatprep.subr.bf16.mxu0 0
        %1754 = vmatpush1.bf16.msra.mxu0 0
        %1755 = vmatprep.subr.bf16.mxu0 0
        %1756 = vmatpush1.bf16.msra.mxu0 0
        %1757 = vmatprep.subr.bf16.mxu0 0
        %1758 = vmatpush1.bf16.msra.mxu0 0
        %1759 = vmatprep.subr.bf16.mxu0 0
        %1760 = vmatpush1.bf16.msra.mxu0 0
        %1761 = vmatprep.subr.bf16.mxu0 0
        %1762 = vmatpush1.bf16.msra.mxu0 0
        %1763 = vmatprep.subr.bf16.mxu0 0
        %1764 = vmatpush1.bf16.msra.mxu0 0
        %1765 = vmatprep.subr.bf16.mxu0 0
        %1766 = vmatpush1.bf16.msra.mxu0 0
        %1767 = vmatprep.subr.bf16.mxu0 0
        %1768 = vmatpush1.bf16.msra.mxu0 0
        %1769 = vmatprep.subr.bf16.mxu0 0
        %1770 = vmatpush1.bf16.msra.mxu0 0
        %1771 = vmatprep.mubr.bf16.mxu0 0
        %1772 = vmatmul.mubr.bf16.gmra.mrb[0].mxu0 %v1737
        %v1773 = vpop.f32.mrb[0].mxu0
        %v1774 = vadd.f32 %v1709, %v1773
        %v1775 = vpop.f32.mrb[0].mxu0
        %v1776 = vpop.f32.mrb[0].mxu0
        %v1777 = vpop.f32.mrb[0].mxu0
        %1778 = vdwg.mxu0
        %v1779 = vadd.f32 %v1618, %v1774
        %v1780 = vld [vmem:[%s818] sm:$0x1]
        %v1781 = vld [vmem:[%s821] sm:$0x1]
        %v1782 = vsel %vm892, %v1779, 0.0
        %1783 = vadd.xlane.f32.xlu0 %v1782
        %v1784 = vpop.xlane.xlu0 %1783
        %v1785 = vmul.f32 %v1784, %v1594
        %v1786 = vsub.f32 %v1779, %v1785
        %v1787 = vmul.f32 %v1786, %v1786
        %v1788 = vsel %vm892, %v1787, 0.0
        %1789 = vadd.xlane.f32.xlu0 %v1788
        %v1790 = vpop.xlane.xlu0 %1789
        %v1791 = vmul.f32 %v1790, %v1594
        %v1792 = vadd.f32 %v1791, 1e-12
        %v1793 = vrsqrt.pop %v1792
        %v1794 = vmul.f32 %v1786, %v1793
        %v1796 = vlaneseq
        %v1797 = vshrl.u32 %v1796, 7
        %v1798 = vsub.s32 0, %v1797
        %v1799 = vrot.slane %v1780, %v1798
        %v1801 = vmul.f32 %v1794, %v1799
        %v1803 = vlaneseq
        %v1804 = vshrl.u32 %v1803, 7
        %v1805 = vsub.s32 0, %v1804
        %v1806 = vrot.slane %v1781, %v1805
        %v1808 = vadd.f32 %v1801, %v1806
        %1809 = vst.msk [vmem:[#allocation2] sm:$0xff] %vm892, %v1808
        %p1810 = scmp.eq.s32.totalorder %s41, 1
        // Predicated region
        $region105: #{tpu_custom_call.1} parent=91 // pred_check
          %p1811 = pneg %p1810
        $region106: #{tpu_custom_call.1} parent=91 // pred_check_branch
          %1813 = sbr.rel (%p1811) target = $region108
        $region107: #{tpu_custom_call.1} parent=91 // pred_region
          %v1814 = vld [vmem:[%s16] sm:$0x1]
          %v1815 = vpack.c.bf16 %v1808, %v1808
          %v1816 = vld [vmem:[%s17] sm:$0x3]
          %1818 = vset.pattern.permute.xlu0 0
          %1819 = vperm.xlu0 %1818, %v1816
          %v1820 = vpop.permute.xlu0 %1819
          %v1823 = vsel %vm892, %v1814, 0
          %v1826 = vsel %vm892, %v1815, 0
          %1828 = vmatprep.subr.bf16.mxu0 0
          %1829 = vmatpush1.bf16.xpose.msra.mxu0 %v1826
          %1830 = vmatprep.subr.bf16.mxu0 0
          %1831 = vmatpush1.bf16.xpose.msra.mxu0 0
          %1832 = vmatprep.subr.bf16.mxu0 0
          %1833 = vmatpush1.bf16.xpose.msra.mxu0 0
          %1834 = vmatprep.subr.bf16.mxu0 0
          %1835 = vmatpush1.bf16.xpose.msra.mxu0 0
          %1836 = vmatprep.subr.bf16.mxu0 0
          %1837 = vmatpush1.bf16.xpose.msra.mxu0 0
          %1838 = vmatprep.subr.bf16.mxu0 0
          %1839 = vmatpush1.bf16.xpose.msra.mxu0 0
          %1840 = vmatprep.subr.bf16.mxu0 0
          %1841 = vmatpush1.bf16.xpose.msra.mxu0 0
          %1842 = vmatprep.subr.bf16.mxu0 0
          %1843 = vmatpush1.bf16.xpose.msra.mxu0 0
          %1844 = vmatprep.subr.bf16.mxu0 0
          %1845 = vmatpush1.bf16.xpose.msra.mxu0 0
          %1846 = vmatprep.subr.bf16.mxu0 0
          %1847 = vmatpush1.bf16.xpose.msra.mxu0 0
          %1848 = vmatprep.subr.bf16.mxu0 0
          %1849 = vmatpush1.bf16.xpose.msra.mxu0 0
          %1850 = vmatprep.subr.bf16.mxu0 0
          %1851 = vmatpush1.bf16.xpose.msra.mxu0 0
          %1852 = vmatprep.subr.bf16.mxu0 0
          %1853 = vmatpush1.bf16.xpose.msra.mxu0 0
          %1854 = vmatprep.subr.bf16.mxu0 0
          %1855 = vmatpush1.bf16.xpose.msra.mxu0 0
          %1856 = vmatprep.subr.bf16.mxu0 0
          %1857 = vmatpush1.bf16.xpose.msra.mxu0 0
          %1858 = vmatprep.subr.bf16.mxu0 0
          %1859 = vmatpush1.bf16.xpose.msra.mxu0 0
          %1860 = vmatprep.mubr.bf16.mxu0 0
          %1861 = vmatmul.mubr.bf16.gmra.mrb[0].mxu0 %v1823
          %v1862 = vpop.f32.mrb[0].mxu0
          %v1863 = vadd.f32 %v1820, %v1862
          %v1864 = vpop.f32.mrb[0].mxu0
          %v1865 = vpop.f32.mrb[0].mxu0
          %v1866 = vpop.f32.mrb[0].mxu0
          %1867 = vdwg.mxu0
          %vm1868 = vcmask 58368
          %1869 = vst.msk [vmem:[%s774] sm:$0x3] %vm1868, %v1863
        $region108: #{tpu_custom_call.1} parent=91 // pred_fallthru
          _
        %s1870 = sand.u32 %s504, 1
        %s1871 = scalar_lea.sflag [#allocation5], %s1870
        %s1872 = sand.u32 %s504, 1
        %s1873 = smul.addr %s1872, 2
        %s1874 = scalar_lea.vmem [#allocation8], %s1873
        // Predicated region
        $region109: #{tpu_custom_call.1} parent=91 // pred_check
          %p1875 = pneg %p514
        $region110: #{tpu_custom_call.1} parent=91 // pred_check_branch
          %1877 = sbr.rel (%p1875) target = $region112
        $region111: #{tpu_custom_call.1} parent=91 // pred_region
          %s1879 = ssub.s32 32, 32
          %1880 = vsyncadd %s1871, %s1879
          %s1881 = smul.addr %s40, 32
          %s1882 = scalar_lea.hbm %s18, %s1881
          %s1884 = sshll.u32 %s1874, 4
          %s1885 = int_to_ptr.vmem [resolvable:$true] %s1884
          %1887 = dma.vmem_to_hbm [thread:$0]  %s1885, 32, %s1882, %s1871
        $region112: #{tpu_custom_call.1} parent=91 // pred_fallthru
          _
      $region92: #{tpu_custom_call.1} parent=5 // pred_fallthru
        _
      %p1888 = scmp.le.s32.totalorder 2, %s31
      // Predicated region
      $region113: #{tpu_custom_call.1} parent=5 // pred_check
        %p1889 = pneg %p1888
      $region114: #{tpu_custom_call.1} parent=5 // pred_check_branch
        %1891 = sbr.rel (%p1889) target = $region116
      $region115: #{tpu_custom_call.1} parent=5 // pred_region
        %s1892 = ssub.s32 %s31, 2
        // Predicated region
        $region117: #{tpu_custom_call.1} parent=115 // pred_check
          %p1893 = pneg %p520
        $region118: #{tpu_custom_call.1} parent=115 // pred_check_branch
          %1895 = sbr.rel (%p1893) target = $region120
        $region119: #{tpu_custom_call.1} parent=115 // pred_region
          %s1896 = sand.u32 %s505, 1
          %s1897 = scalar_lea.sflag [#allocation5], %s1896
          %s1898 = sand.u32 %s505, 1
          %s1899 = smul.addr %s1898, 2
          %s1900 = scalar_lea.vmem [#allocation8], %s1899
          %1901 = dma.done %s1897, 32
        $region120: #{tpu_custom_call.1} parent=115 // pred_fallthru
          _
      $region116: #{tpu_custom_call.1} parent=5 // pred_fallthru
        _
    $region6: #{tpu_custom_call.1} parent=1 // loop_footer
      %s35 = sadd.s32 1, %s31
    $region7: #{tpu_custom_call.1} parent=1 // loop_footer_branch
      %30 = sbr.rel target = $region3
    $region8: #{tpu_custom_call.1} parent=1 // loop_exit
      _
    %1902 = vsyncpa [#allocation4], 1
    %s1903 = scalar_lea.sflag [#allocation4], 1
    %1904 = vsyncpa %s1903, 1
    %1905 = vsyncpa [#allocation7], 1
    %1906 = vsyncpa [#allocation5], 1
    %s1907 = scalar_lea.sflag [#allocation5], 1
    %1908 = vsyncpa %s1907, 1

</llo_original>
